<compile_context>
chip_gen: v7x
topology: tpu7x:2x2x1
jax: 0.10.0
libtpu: 0.0.40
codegen_flags: <defaults>
</compile_context>

<pallas_src>
import functools

import jax
import jax.numpy as jnp
from jax.experimental import pallas as pl
from jax.experimental.pallas import tpu as pltpu


def _round_up(n, m):
    return ((n + m - 1) // m) * m


def _lstm_fc_kernel(x_ref, wih_ref, bg_ref, whh_ref, w1_ref, b1_ref, w2_ref, b2_ref,
                    out_ref, xproj_ref, *, hidden_pad, seq_len, block_batch):
    """One grid step = one batch block: whole-sequence LSTM recurrence + fc1 + fc2."""
    Hp = hidden_pad
    BB = block_batch

    # --- Hoisted input projection: one big MXU pass for all time steps, bias folded in.
    xproj_ref[...] = (
        jnp.dot(x_ref[0], wih_ref[...], preferred_element_type=jnp.float32)
        + bg_ref[...])                                            # (T*BB, 4Hp) f32

    whh = whh_ref[...]                                            # (Hp, 4Hp) bf16, hoisted

    def step(t, carry):
        h, c = carry                                              # (BB, Hp) f32 each
        start = pl.multiple_of(t * BB, BB)
        x_proj_t = xproj_ref[pl.ds(start, BB), :]                 # (BB, 4Hp) f32
        gates = x_proj_t + jnp.dot(h.astype(whh.dtype), whh,
                                   preferred_element_type=jnp.float32)
        # Gate layout [ i | f | o | g ], each Hp wide -> lane-aligned slices.
        sig = jax.nn.sigmoid(gates[:, :3 * Hp])                   # one EUP launch for i,f,o
        i_g = sig[:, 0:Hp]
        f_g = sig[:, Hp:2 * Hp]
        o_g = sig[:, 2 * Hp:3 * Hp]
        g_g = jnp.tanh(gates[:, 3 * Hp:])
        c_new = f_g * c + i_g * g_g
        h_new = o_g * jnp.tanh(c_new)
        return (h_new, c_new)

    h0 = jnp.zeros((BB, Hp), jnp.float32)
    c0 = jnp.zeros((BB, Hp), jnp.float32)
    # T is small here; for long sequences switch to a bounded unroll (e.g. unroll=8).
    h_T, _ = jax.lax.fori_loop(0, seq_len, step, (h0, c0), unroll=True)

    y1 = jnp.dot(h_T.astype(w1_ref.dtype), w1_ref[...],
                 preferred_element_type=jnp.float32) + b1_ref[...]
    y2 = jnp.dot(y1.astype(w2_ref.dtype), w2_ref[...],
                 preferred_element_type=jnp.float32) + b2_ref[...]
    out_ref[...] = y2.astype(out_ref.dtype)                       # (BB, Op) lane-dense store


# PyTorch gate order is [i, f, g, o]; kernel uses [i, f, o, g] (torch idx -> slot).
_GATE_SLOTS = ((0, 0), (1, 1), (2, 3), (3, 2))


def _pack_gate_weight(w, k_pad, h_pad):
    """(4H, K) torch-order weight -> (Kp, 4*Hp) transposed, per-gate zero-padded."""
    H = w.shape[0] // 4
    K = w.shape[1]
    out = jnp.zeros((k_pad, 4 * h_pad), jnp.float32)
    for torch_idx, slot in _GATE_SLOTS:
        out = out.at[:K, slot * h_pad:slot * h_pad + H].set(
            w[torch_idx * H:(torch_idx + 1) * H, :].T)
    return out


def _pack_gate_bias(b, h_pad):
    """(4H,) torch-order bias -> (1, 4*Hp), per-gate zero-padded."""
    H = b.shape[0] // 4
    out = jnp.zeros((1, 4 * h_pad), jnp.float32)
    for torch_idx, slot in _GATE_SLOTS:
        out = out.at[0, slot * h_pad:slot * h_pad + H].set(
            b[torch_idx * H:(torch_idx + 1) * H])
    return out


def lstm_model_forward(x, params, *, block_batch=8):
    """Pallas implementation of LSTMModel.forward.

    x: (B, T, D) float32, batch-first (same as the PyTorch module).
    params: PyTorch-shaped tensors:
        w_ih (4H, D), w_hh (4H, H), b_ih (4H,), b_hh (4H,)
        fc1_w (H, H), fc1_b (H,), fc2_w (O, H), fc2_b (O,)
    Returns (B, O) float32.
    """
    B, T, D = x.shape
    H = params["w_hh"].shape[1]
    O = params["fc2_w"].shape[0]

    BB = block_batch                      # rows per batch block (fills f32 sublanes)
    Bp = _round_up(B, BB)
    NB = Bp // BB                         # parallel grid axis (2 TCs on v7x)
    Dp = _round_up(D, 128)
    Hp = _round_up(H, 128)
    Op = _round_up(O, 128)

    # Lane-dense, block-time-major input: (NB, T*BB, Dp), bf16 MXU operand.
    x_pad = jnp.zeros((Bp, T, Dp), jnp.float32).at[:B, :, :D].set(x)
    x_blk = (x_pad.reshape(NB, BB, T, Dp)
                  .transpose(0, 2, 1, 3)
                  .reshape(NB, T * BB, Dp)
                  .astype(jnp.bfloat16))

    # Weights: gate-reordered, zero-padded, bf16 for the MXU; biases stay f32.
    wih = _pack_gate_weight(params["w_ih"], Dp, Hp).astype(jnp.bfloat16)   # (Dp, 4Hp)
    whh = _pack_gate_weight(params["w_hh"], Hp, Hp).astype(jnp.bfloat16)   # (Hp, 4Hp)
    b_gates = _pack_gate_bias(params["b_ih"] + params["b_hh"], Hp)         # (1, 4Hp) f32

    w1 = jnp.zeros((Hp, Hp), jnp.float32).at[:H, :H].set(
        params["fc1_w"].T).astype(jnp.bfloat16)
    b1 = jnp.zeros((1, Hp), jnp.float32).at[0, :H].set(params["fc1_b"])
    w2 = jnp.zeros((Hp, Op), jnp.float32).at[:H, :O].set(
        params["fc2_w"].T).astype(jnp.bfloat16)
    b2 = jnp.zeros((1, Op), jnp.float32).at[0, :O].set(params["fc2_b"])

    kernel = functools.partial(_lstm_fc_kernel,
                               hidden_pad=Hp, seq_len=T, block_batch=BB)

    out_pad = pl.pallas_call(
        kernel,
        out_shape=jax.ShapeDtypeStruct((Bp, Op), jnp.float32),
        grid_spec=pltpu.PrefetchScalarGridSpec(
            num_scalar_prefetch=0,
            grid=(NB,),
            in_specs=[
                pl.BlockSpec((1, T * BB, Dp), lambda nb: (nb, 0, 0)),   # x block
                pl.BlockSpec((Dp, 4 * Hp), lambda nb: (0, 0)),          # W_ih^T (padded)
                pl.BlockSpec((1, 4 * Hp), lambda nb: (0, 0)),           # gate bias
                pl.BlockSpec((Hp, 4 * Hp), lambda nb: (0, 0)),          # W_hh^T (padded)
                pl.BlockSpec((Hp, Hp), lambda nb: (0, 0)),              # fc1 W^T
                pl.BlockSpec((1, Hp), lambda nb: (0, 0)),               # fc1 b
                pl.BlockSpec((Hp, Op), lambda nb: (0, 0)),              # fc2 W^T
                pl.BlockSpec((1, Op), lambda nb: (0, 0)),               # fc2 b
            ],
            out_specs=pl.BlockSpec((BB, Op), lambda nb: (nb, 0)),
            scratch_shapes=[pltpu.VMEM((T * BB, 4 * Hp), jnp.float32)], # x_proj
        ),
        compiler_params=pltpu.CompilerParams(
            dimension_semantics=("parallel",),
            vmem_limit_bytes=32 * 1024 * 1024),
    )(x_blk, wih, b_gates, whh, w1, b1, w2, b2)

    return out_pad[:B, :O]


def lstm_model_reference(x, params):
    """Pure-JAX f32 reference (mirrors torch.nn.LSTM + two Linear layers)."""
    B, T, D = x.shape
    H = params["w_hh"].shape[1]
    wih_t = params["w_ih"].T
    whh_t = params["w_hh"].T
    b = params["b_ih"] + params["b_hh"]

    def step(carry, x_t):
        h, c = carry
        gates = x_t @ wih_t + h @ whh_t + b
        i = jax.nn.sigmoid(gates[:, 0:H])
        f = jax.nn.sigmoid(gates[:, H:2 * H])
        g = jnp.tanh(gates[:, 2 * H:3 * H])
        o = jax.nn.sigmoid(gates[:, 3 * H:4 * H])
        c = f * c + i * g
        h = o * jnp.tanh(c)
        return (h, c), None

    h0 = jnp.zeros((B, H), jnp.float32)
    c0 = jnp.zeros((B, H), jnp.float32)
    (h_T, _), _ = jax.lax.scan(step, (h0, c0), jnp.transpose(x, (1, 0, 2)))
    y = h_T @ params["fc1_w"].T + params["fc1_b"]
    y = y @ params["fc2_w"].T + params["fc2_b"]
    return y


def init_params(key, input_size, hidden_size, output_size):
    """Deterministic synthetic parameters with PyTorch nn.LSTM / nn.Linear shapes."""
    ks = jax.random.split(key, 8)
    k = 1.0 / jnp.sqrt(hidden_size)
    u = lambda kk, shape: jax.random.uniform(kk, shape, jnp.float32, -k, k)
    return {
        "w_ih": u(ks[0], (4 * hidden_size, input_size)),
        "w_hh": u(ks[1], (4 * hidden_size, hidden_size)),
        "b_ih": u(ks[2], (4 * hidden_size,)),
        "b_hh": u(ks[3], (4 * hidden_size,)),
        "fc1_w": u(ks[4], (hidden_size, hidden_size)),
        "fc1_b": u(ks[5], (hidden_size,)),
        "fc2_w": u(ks[6], (output_size, hidden_size)),
        "fc2_b": u(ks[7], (output_size,)),
    }


if __name__ == "__main__":
    B, T, D, H, O = 2, 8, 16, 32, 4

    key = jax.random.PRNGKey(0)
    kx, kp = jax.random.split(key)
    x = jax.random.normal(kx, (B, T, D), jnp.float32)
    params = init_params(kp, D, H, O)

    out = lstm_model_forward(x, params)
    out = jax.block_until_ready(out)

    ref = lstm_model_reference(x, params)
    assert out.shape == (B, O)
    # Tolerance accounts for bf16 MXU operands (f32 accumulation, f32 recurrent state).
    assert jnp.allclose(out, ref, atol=3e-2, rtol=3e-2), (out, ref)

    print("KERNEL_OK")
</pallas_src>

<mosaic_0001>
module attributes {stable_mosaic.version = 11 : i64} {
  func.func @_lstm_fc_kernel(%arg0: i32, %arg1: memref<1x64x128xbf16, #tpu.memory_space<vmem>>, %arg2: memref<128x512xbf16, #tpu.memory_space<vmem>>, %arg3: memref<1x512xf32, #tpu.memory_space<vmem>>, %arg4: memref<128x512xbf16, #tpu.memory_space<vmem>>, %arg5: memref<128x128xbf16, #tpu.memory_space<vmem>>, %arg6: memref<1x128xf32, #tpu.memory_space<vmem>>, %arg7: memref<128x128xbf16, #tpu.memory_space<vmem>>, %arg8: memref<1x128xf32, #tpu.memory_space<vmem>>, %arg9: memref<8x128xf32, #tpu.memory_space<vmem>>, %arg10: memref<64x512xf32, #tpu.memory_space<vmem>>) attributes {dimension_semantics = [#tpu.dimension_semantics<parallel>], iteration_bounds = array<i64: 1>, scalar_prefetch = 0 : i64, scratch_operands = 1 : i64, tpu.core_type = #tpu.core_type<tc>, window_params = [{transform_indices = @transform_0, window_bounds = array<i64: 1, 64, 128>}, {pipeline_mode = #tpu.pipeline_mode<synchronous>, transform_indices = @transform_1, window_bounds = array<i64: 128, 512>}, {pipeline_mode = #tpu.pipeline_mode<synchronous>, transform_indices = @transform_2, window_bounds = array<i64: 1, 512>}, {pipeline_mode = #tpu.pipeline_mode<synchronous>, transform_indices = @transform_3, window_bounds = array<i64: 128, 512>}, {pipeline_mode = #tpu.pipeline_mode<synchronous>, transform_indices = @transform_4, window_bounds = array<i64: 128, 128>}, {pipeline_mode = #tpu.pipeline_mode<synchronous>, transform_indices = @transform_5, window_bounds = array<i64: 1, 128>}, {pipeline_mode = #tpu.pipeline_mode<synchronous>, transform_indices = @transform_6, window_bounds = array<i64: 128, 128>}, {pipeline_mode = #tpu.pipeline_mode<synchronous>, transform_indices = @transform_7, window_bounds = array<i64: 1, 128>}, {transform_indices = @transform_8, window_bounds = array<i64: 8, 128>}]} {
    %c0 = arith.constant 0 : index
    %c0_0 = arith.constant 0 : index
    %c0_1 = arith.constant 0 : index
    %0 = vector.load %arg1[%c0, %c0_0, %c0_1] : memref<1x64x128xbf16, #tpu.memory_space<vmem>>, vector<1x64x128xbf16>
    %1 = vector.shape_cast %0 : vector<1x64x128xbf16> to vector<64x128xbf16>
    %c0_2 = arith.constant 0 : index
    %c0_3 = arith.constant 0 : index
    %2 = vector.load %arg2[%c0_2, %c0_3] : memref<128x512xbf16, #tpu.memory_space<vmem>>, vector<128x512xbf16>
    %cst = arith.constant dense<0.000000e+00> : vector<64x512xf32>
    %3 = tpu.matmul %1, %2, %cst {dimension_numbers = #tpu.dot_dimension_numbers<[1], [0], [0], [1], [0, 0, 1, 1], [], []>} : vector<64x128xbf16>, vector<128x512xbf16>, vector<64x512xf32> -> vector<64x512xf32>
    %c0_4 = arith.constant 0 : index
    %c0_5 = arith.constant 0 : index
    %4 = vector.load %arg3[%c0_4, %c0_5] : memref<1x512xf32, #tpu.memory_space<vmem>>, vector<1x512xf32>
    %5 = vector.broadcast %4 : vector<1x512xf32> to vector<64x512xf32>
    %6 = arith.addf %3, %5 : vector<64x512xf32>
    %c0_6 = arith.constant 0 : index
    %c0_7 = arith.constant 0 : index
    %7 = vector.load %arg10[%c0_6, %c0_7] : memref<64x512xf32, #tpu.memory_space<vmem>>, vector<64x512xf32>
    tpu.vector_store %arg10[%c0_6, %c0_7], %6 {strides = array<i32>} : memref<64x512xf32, #tpu.memory_space<vmem>>, vector<64x512xf32>,
    %c0_8 = arith.constant 0 : index
    %c0_9 = arith.constant 0 : index
    %8 = vector.load %arg4[%c0_8, %c0_9] : memref<128x512xbf16, #tpu.memory_space<vmem>>, vector<128x512xbf16>
    %cst_10 = arith.constant 0.000000e+00 : f32
    %9 = vector.broadcast %cst_10 : f32 to vector<8x128xf32>
    %cst_11 = arith.constant 0.000000e+00 : f32
    %10 = vector.broadcast %cst_11 : f32 to vector<8x128xf32>
    %c0_i32 = arith.constant 0 : i32
    %c8_i32 = arith.constant 8 : i32
    %11 = arith.muli %c0_i32, %c8_i32 : i32
    %12 = tpu.assume_multiple %11, 8 : i32
    %13 = arith.index_cast %12 : i32 to index
    %c0_12 = arith.constant 0 : index
    %14 = vector.load %arg10[%13, %c0_12] : memref<64x512xf32, #tpu.memory_space<vmem>>, vector<8x512xf32>
    %15 = arith.truncf %9 : vector<8x128xf32> to vector<8x128xbf16>
    %cst_13 = arith.constant dense<0.000000e+00> : vector<8x512xf32>
    %16 = tpu.matmul %15, %8, %cst_13 {dimension_numbers = #tpu.dot_dimension_numbers<[1], [0], [0], [1], [0, 0, 1, 1], [], []>} : vector<8x128xbf16>, vector<128x512xbf16>, vector<8x512xf32> -> vector<8x512xf32>
    %17 = arith.addf %14, %16 : vector<8x512xf32>
    %18 = vector.extract_strided_slice %17 {offsets = [0, 0], sizes = [8, 384], strides = [1, 1]} : vector<8x512xf32> to vector<8x384xf32>
    %19 = arith.negf %18 : vector<8x384xf32>
    %20 = math.exp %19 : vector<8x384xf32>
    %cst_14 = arith.constant 1.000000e+00 : f32
    %21 = vector.broadcast %cst_14 : f32 to vector<8x384xf32>
    %22 = arith.addf %21, %20 : vector<8x384xf32>
    %23 = arith.divf %21, %22 : vector<8x384xf32>
    %24 = vector.extract_strided_slice %23 {offsets = [0, 0], sizes = [8, 128], strides = [1, 1]} : vector<8x384xf32> to vector<8x128xf32>
    %25 = vector.extract_strided_slice %23 {offsets = [0, 128], sizes = [8, 128], strides = [1, 1]} : vector<8x384xf32> to vector<8x128xf32>
    %26 = vector.extract_strided_slice %23 {offsets = [0, 256], sizes = [8, 128], strides = [1, 1]} : vector<8x384xf32> to vector<8x128xf32>
    %27 = vector.extract_strided_slice %17 {offsets = [0, 384], sizes = [8, 128], strides = [1, 1]} : vector<8x512xf32> to vector<8x128xf32>
    %28 = math.tanh %27 : vector<8x128xf32>
    %29 = arith.mulf %25, %10 : vector<8x128xf32>
    %30 = arith.mulf %24, %28 : vector<8x128xf32>
    %31 = arith.addf %29, %30 : vector<8x128xf32>
    %32 = math.tanh %31 : vector<8x128xf32>
    %33 = arith.mulf %26, %32 : vector<8x128xf32>
    %c1_i32 = arith.constant 1 : i32
    %c8_i32_15 = arith.constant 8 : i32
    %34 = arith.muli %c1_i32, %c8_i32_15 : i32
    %35 = tpu.assume_multiple %34, 8 : i32
    %36 = arith.index_cast %35 : i32 to index
    %c0_16 = arith.constant 0 : index
    %37 = vector.load %arg10[%36, %c0_16] : memref<64x512xf32, #tpu.memory_space<vmem>>, vector<8x512xf32>
    %38 = arith.truncf %33 : vector<8x128xf32> to vector<8x128xbf16>
    %cst_17 = arith.constant dense<0.000000e+00> : vector<8x512xf32>
    %39 = tpu.matmul %38, %8, %cst_17 {dimension_numbers = #tpu.dot_dimension_numbers<[1], [0], [0], [1], [0, 0, 1, 1], [], []>} : vector<8x128xbf16>, vector<128x512xbf16>, vector<8x512xf32> -> vector<8x512xf32>
    %40 = arith.addf %37, %39 : vector<8x512xf32>
    %41 = vector.extract_strided_slice %40 {offsets = [0, 0], sizes = [8, 384], strides = [1, 1]} : vector<8x512xf32> to vector<8x384xf32>
    %42 = arith.negf %41 : vector<8x384xf32>
    %43 = math.exp %42 : vector<8x384xf32>
    %cst_18 = arith.constant 1.000000e+00 : f32
    %44 = vector.broadcast %cst_18 : f32 to vector<8x384xf32>
    %45 = arith.addf %44, %43 : vector<8x384xf32>
    %46 = arith.divf %44, %45 : vector<8x384xf32>
    %47 = vector.extract_strided_slice %46 {offsets = [0, 0], sizes = [8, 128], strides = [1, 1]} : vector<8x384xf32> to vector<8x128xf32>
    %48 = vector.extract_strided_slice %46 {offsets = [0, 128], sizes = [8, 128], strides = [1, 1]} : vector<8x384xf32> to vector<8x128xf32>
    %49 = vector.extract_strided_slice %46 {offsets = [0, 256], sizes = [8, 128], strides = [1, 1]} : vector<8x384xf32> to vector<8x128xf32>
    %50 = vector.extract_strided_slice %40 {offsets = [0, 384], sizes = [8, 128], strides = [1, 1]} : vector<8x512xf32> to vector<8x128xf32>
    %51 = math.tanh %50 : vector<8x128xf32>
    %52 = arith.mulf %48, %31 : vector<8x128xf32>
    %53 = arith.mulf %47, %51 : vector<8x128xf32>
    %54 = arith.addf %52, %53 : vector<8x128xf32>
    %55 = math.tanh %54 : vector<8x128xf32>
    %56 = arith.mulf %49, %55 : vector<8x128xf32>
    %c2_i32 = arith.constant 2 : i32
    %c8_i32_19 = arith.constant 8 : i32
    %57 = arith.muli %c2_i32, %c8_i32_19 : i32
    %58 = tpu.assume_multiple %57, 8 : i32
    %59 = arith.index_cast %58 : i32 to index
    %c0_20 = arith.constant 0 : index
    %60 = vector.load %arg10[%59, %c0_20] : memref<64x512xf32, #tpu.memory_space<vmem>>, vector<8x512xf32>
    %61 = arith.truncf %56 : vector<8x128xf32> to vector<8x128xbf16>
    %cst_21 = arith.constant dense<0.000000e+00> : vector<8x512xf32>
    %62 = tpu.matmul %61, %8, %cst_21 {dimension_numbers = #tpu.dot_dimension_numbers<[1], [0], [0], [1], [0, 0, 1, 1], [], []>} : vector<8x128xbf16>, vector<128x512xbf16>, vector<8x512xf32> -> vector<8x512xf32>
    %63 = arith.addf %60, %62 : vector<8x512xf32>
    %64 = vector.extract_strided_slice %63 {offsets = [0, 0], sizes = [8, 384], strides = [1, 1]} : vector<8x512xf32> to vector<8x384xf32>
    %65 = arith.negf %64 : vector<8x384xf32>
    %66 = math.exp %65 : vector<8x384xf32>
    %cst_22 = arith.constant 1.000000e+00 : f32
    %67 = vector.broadcast %cst_22 : f32 to vector<8x384xf32>
    %68 = arith.addf %67, %66 : vector<8x384xf32>
    %69 = arith.divf %67, %68 : vector<8x384xf32>
    %70 = vector.extract_strided_slice %69 {offsets = [0, 0], sizes = [8, 128], strides = [1, 1]} : vector<8x384xf32> to vector<8x128xf32>
    %71 = vector.extract_strided_slice %69 {offsets = [0, 128], sizes = [8, 128], strides = [1, 1]} : vector<8x384xf32> to vector<8x128xf32>
    %72 = vector.extract_strided_slice %69 {offsets = [0, 256], sizes = [8, 128], strides = [1, 1]} : vector<8x384xf32> to vector<8x128xf32>
    %73 = vector.extract_strided_slice %63 {offsets = [0, 384], sizes = [8, 128], strides = [1, 1]} : vector<8x512xf32> to vector<8x128xf32>
    %74 = math.tanh %73 : vector<8x128xf32>
    %75 = arith.mulf %71, %54 : vector<8x128xf32>
    %76 = arith.mulf %70, %74 : vector<8x128xf32>
    %77 = arith.addf %75, %76 : vector<8x128xf32>
    %78 = math.tanh %77 : vector<8x128xf32>
    %79 = arith.mulf %72, %78 : vector<8x128xf32>
    %c3_i32 = arith.constant 3 : i32
    %c8_i32_23 = arith.constant 8 : i32
    %80 = arith.muli %c3_i32, %c8_i32_23 : i32
    %81 = tpu.assume_multiple %80, 8 : i32
    %82 = arith.index_cast %81 : i32 to index
    %c0_24 = arith.constant 0 : index
    %83 = vector.load %arg10[%82, %c0_24] : memref<64x512xf32, #tpu.memory_space<vmem>>, vector<8x512xf32>
    %84 = arith.truncf %79 : vector<8x128xf32> to vector<8x128xbf16>
    %cst_25 = arith.constant dense<0.000000e+00> : vector<8x512xf32>
    %85 = tpu.matmul %84, %8, %cst_25 {dimension_numbers = #tpu.dot_dimension_numbers<[1], [0], [0], [1], [0, 0, 1, 1], [], []>} : vector<8x128xbf16>, vector<128x512xbf16>, vector<8x512xf32> -> vector<8x512xf32>
    %86 = arith.addf %83, %85 : vector<8x512xf32>
    %87 = vector.extract_strided_slice %86 {offsets = [0, 0], sizes = [8, 384], strides = [1, 1]} : vector<8x512xf32> to vector<8x384xf32>
    %88 = arith.negf %87 : vector<8x384xf32>
    %89 = math.exp %88 : vector<8x384xf32>
    %cst_26 = arith.constant 1.000000e+00 : f32
    %90 = vector.broadcast %cst_26 : f32 to vector<8x384xf32>
    %91 = arith.addf %90, %89 : vector<8x384xf32>
    %92 = arith.divf %90, %91 : vector<8x384xf32>
    %93 = vector.extract_strided_slice %92 {offsets = [0, 0], sizes = [8, 128], strides = [1, 1]} : vector<8x384xf32> to vector<8x128xf32>
    %94 = vector.extract_strided_slice %92 {offsets = [0, 128], sizes = [8, 128], strides = [1, 1]} : vector<8x384xf32> to vector<8x128xf32>
    %95 = vector.extract_strided_slice %92 {offsets = [0, 256], sizes = [8, 128], strides = [1, 1]} : vector<8x384xf32> to vector<8x128xf32>
    %96 = vector.extract_strided_slice %86 {offsets = [0, 384], sizes = [8, 128], strides = [1, 1]} : vector<8x512xf32> to vector<8x128xf32>
    %97 = math.tanh %96 : vector<8x128xf32>
    %98 = arith.mulf %94, %77 : vector<8x128xf32>
    %99 = arith.mulf %93, %97 : vector<8x128xf32>
    %100 = arith.addf %98, %99 : vector<8x128xf32>
    %101 = math.tanh %100 : vector<8x128xf32>
    %102 = arith.mulf %95, %101 : vector<8x128xf32>
    %c4_i32 = arith.constant 4 : i32
    %c8_i32_27 = arith.constant 8 : i32
    %103 = arith.muli %c4_i32, %c8_i32_27 : i32
    %104 = tpu.assume_multiple %103, 8 : i32
    %105 = arith.index_cast %104 : i32 to index
    %c0_28 = arith.constant 0 : index
    %106 = vector.load %arg10[%105, %c0_28] : memref<64x512xf32, #tpu.memory_space<vmem>>, vector<8x512xf32>
    %107 = arith.truncf %102 : vector<8x128xf32> to vector<8x128xbf16>
    %cst_29 = arith.constant dense<0.000000e+00> : vector<8x512xf32>
    %108 = tpu.matmul %107, %8, %cst_29 {dimension_numbers = #tpu.dot_dimension_numbers<[1], [0], [0], [1], [0, 0, 1, 1], [], []>} : vector<8x128xbf16>, vector<128x512xbf16>, vector<8x512xf32> -> vector<8x512xf32>
    %109 = arith.addf %106, %108 : vector<8x512xf32>
    %110 = vector.extract_strided_slice %109 {offsets = [0, 0], sizes = [8, 384], strides = [1, 1]} : vector<8x512xf32> to vector<8x384xf32>
    %111 = arith.negf %110 : vector<8x384xf32>
    %112 = math.exp %111 : vector<8x384xf32>
    %cst_30 = arith.constant 1.000000e+00 : f32
    %113 = vector.broadcast %cst_30 : f32 to vector<8x384xf32>
    %114 = arith.addf %113, %112 : vector<8x384xf32>
    %115 = arith.divf %113, %114 : vector<8x384xf32>
    %116 = vector.extract_strided_slice %115 {offsets = [0, 0], sizes = [8, 128], strides = [1, 1]} : vector<8x384xf32> to vector<8x128xf32>
    %117 = vector.extract_strided_slice %115 {offsets = [0, 128], sizes = [8, 128], strides = [1, 1]} : vector<8x384xf32> to vector<8x128xf32>
    %118 = vector.extract_strided_slice %115 {offsets = [0, 256], sizes = [8, 128], strides = [1, 1]} : vector<8x384xf32> to vector<8x128xf32>
    %119 = vector.extract_strided_slice %109 {offsets = [0, 384], sizes = [8, 128], strides = [1, 1]} : vector<8x512xf32> to vector<8x128xf32>
    %120 = math.tanh %119 : vector<8x128xf32>
    %121 = arith.mulf %117, %100 : vector<8x128xf32>
    %122 = arith.mulf %116, %120 : vector<8x128xf32>
    %123 = arith.addf %121, %122 : vector<8x128xf32>
    %124 = math.tanh %123 : vector<8x128xf32>
    %125 = arith.mulf %118, %124 : vector<8x128xf32>
    %c5_i32 = arith.constant 5 : i32
    %c8_i32_31 = arith.constant 8 : i32
    %126 = arith.muli %c5_i32, %c8_i32_31 : i32
    %127 = tpu.assume_multiple %126, 8 : i32
    %128 = arith.index_cast %127 : i32 to index
    %c0_32 = arith.constant 0 : index
    %129 = vector.load %arg10[%128, %c0_32] : memref<64x512xf32, #tpu.memory_space<vmem>>, vector<8x512xf32>
    %130 = arith.truncf %125 : vector<8x128xf32> to vector<8x128xbf16>
    %cst_33 = arith.constant dense<0.000000e+00> : vector<8x512xf32>
    %131 = tpu.matmul %130, %8, %cst_33 {dimension_numbers = #tpu.dot_dimension_numbers<[1], [0], [0], [1], [0, 0, 1, 1], [], []>} : vector<8x128xbf16>, vector<128x512xbf16>, vector<8x512xf32> -> vector<8x512xf32>
    %132 = arith.addf %129, %131 : vector<8x512xf32>
    %133 = vector.extract_strided_slice %132 {offsets = [0, 0], sizes = [8, 384], strides = [1, 1]} : vector<8x512xf32> to vector<8x384xf32>
    %134 = arith.negf %133 : vector<8x384xf32>
    %135 = math.exp %134 : vector<8x384xf32>
    %cst_34 = arith.constant 1.000000e+00 : f32
    %136 = vector.broadcast %cst_34 : f32 to vector<8x384xf32>
    %137 = arith.addf %136, %135 : vector<8x384xf32>
    %138 = arith.divf %136, %137 : vector<8x384xf32>
    %139 = vector.extract_strided_slice %138 {offsets = [0, 0], sizes = [8, 128], strides = [1, 1]} : vector<8x384xf32> to vector<8x128xf32>
    %140 = vector.extract_strided_slice %138 {offsets = [0, 128], sizes = [8, 128], strides = [1, 1]} : vector<8x384xf32> to vector<8x128xf32>
    %141 = vector.extract_strided_slice %138 {offsets = [0, 256], sizes = [8, 128], strides = [1, 1]} : vector<8x384xf32> to vector<8x128xf32>
    %142 = vector.extract_strided_slice %132 {offsets = [0, 384], sizes = [8, 128], strides = [1, 1]} : vector<8x512xf32> to vector<8x128xf32>
    %143 = math.tanh %142 : vector<8x128xf32>
    %144 = arith.mulf %140, %123 : vector<8x128xf32>
    %145 = arith.mulf %139, %143 : vector<8x128xf32>
    %146 = arith.addf %144, %145 : vector<8x128xf32>
    %147 = math.tanh %146 : vector<8x128xf32>
    %148 = arith.mulf %141, %147 : vector<8x128xf32>
    %c6_i32 = arith.constant 6 : i32
    %c8_i32_35 = arith.constant 8 : i32
    %149 = arith.muli %c6_i32, %c8_i32_35 : i32
    %150 = tpu.assume_multiple %149, 8 : i32
    %151 = arith.index_cast %150 : i32 to index
    %c0_36 = arith.constant 0 : index
    %152 = vector.load %arg10[%151, %c0_36] : memref<64x512xf32, #tpu.memory_space<vmem>>, vector<8x512xf32>
    %153 = arith.truncf %148 : vector<8x128xf32> to vector<8x128xbf16>
    %cst_37 = arith.constant dense<0.000000e+00> : vector<8x512xf32>
    %154 = tpu.matmul %153, %8, %cst_37 {dimension_numbers = #tpu.dot_dimension_numbers<[1], [0], [0], [1], [0, 0, 1, 1], [], []>} : vector<8x128xbf16>, vector<128x512xbf16>, vector<8x512xf32> -> vector<8x512xf32>
    %155 = arith.addf %152, %154 : vector<8x512xf32>
    %156 = vector.extract_strided_slice %155 {offsets = [0, 0], sizes = [8, 384], strides = [1, 1]} : vector<8x512xf32> to vector<8x384xf32>
    %157 = arith.negf %156 : vector<8x384xf32>
    %158 = math.exp %157 : vector<8x384xf32>
    %cst_38 = arith.constant 1.000000e+00 : f32
    %159 = vector.broadcast %cst_38 : f32 to vector<8x384xf32>
    %160 = arith.addf %159, %158 : vector<8x384xf32>
    %161 = arith.divf %159, %160 : vector<8x384xf32>
    %162 = vector.extract_strided_slice %161 {offsets = [0, 0], sizes = [8, 128], strides = [1, 1]} : vector<8x384xf32> to vector<8x128xf32>
    %163 = vector.extract_strided_slice %161 {offsets = [0, 128], sizes = [8, 128], strides = [1, 1]} : vector<8x384xf32> to vector<8x128xf32>
    %164 = vector.extract_strided_slice %161 {offsets = [0, 256], sizes = [8, 128], strides = [1, 1]} : vector<8x384xf32> to vector<8x128xf32>
    %165 = vector.extract_strided_slice %155 {offsets = [0, 384], sizes = [8, 128], strides = [1, 1]} : vector<8x512xf32> to vector<8x128xf32>
    %166 = math.tanh %165 : vector<8x128xf32>
    %167 = arith.mulf %163, %146 : vector<8x128xf32>
    %168 = arith.mulf %162, %166 : vector<8x128xf32>
    %169 = arith.addf %167, %168 : vector<8x128xf32>
    %170 = math.tanh %169 : vector<8x128xf32>
    %171 = arith.mulf %164, %170 : vector<8x128xf32>
    %c7_i32 = arith.constant 7 : i32
    %c8_i32_39 = arith.constant 8 : i32
    %172 = arith.muli %c7_i32, %c8_i32_39 : i32
    %173 = tpu.assume_multiple %172, 8 : i32
    %174 = arith.index_cast %173 : i32 to index
    %c0_40 = arith.constant 0 : index
    %175 = vector.load %arg10[%174, %c0_40] : memref<64x512xf32, #tpu.memory_space<vmem>>, vector<8x512xf32>
    %176 = arith.truncf %171 : vector<8x128xf32> to vector<8x128xbf16>
    %cst_41 = arith.constant dense<0.000000e+00> : vector<8x512xf32>
    %177 = tpu.matmul %176, %8, %cst_41 {dimension_numbers = #tpu.dot_dimension_numbers<[1], [0], [0], [1], [0, 0, 1, 1], [], []>} : vector<8x128xbf16>, vector<128x512xbf16>, vector<8x512xf32> -> vector<8x512xf32>
    %178 = arith.addf %175, %177 : vector<8x512xf32>
    %179 = vector.extract_strided_slice %178 {offsets = [0, 0], sizes = [8, 384], strides = [1, 1]} : vector<8x512xf32> to vector<8x384xf32>
    %180 = arith.negf %179 : vector<8x384xf32>
    %181 = math.exp %180 : vector<8x384xf32>
    %cst_42 = arith.constant 1.000000e+00 : f32
    %182 = vector.broadcast %cst_42 : f32 to vector<8x384xf32>
    %183 = arith.addf %182, %181 : vector<8x384xf32>
    %184 = arith.divf %182, %183 : vector<8x384xf32>
    %185 = vector.extract_strided_slice %184 {offsets = [0, 0], sizes = [8, 128], strides = [1, 1]} : vector<8x384xf32> to vector<8x128xf32>
    %186 = vector.extract_strided_slice %184 {offsets = [0, 128], sizes = [8, 128], strides = [1, 1]} : vector<8x384xf32> to vector<8x128xf32>
    %187 = vector.extract_strided_slice %184 {offsets = [0, 256], sizes = [8, 128], strides = [1, 1]} : vector<8x384xf32> to vector<8x128xf32>
    %188 = vector.extract_strided_slice %178 {offsets = [0, 384], sizes = [8, 128], strides = [1, 1]} : vector<8x512xf32> to vector<8x128xf32>
    %189 = math.tanh %188 : vector<8x128xf32>
    %190 = arith.mulf %186, %169 : vector<8x128xf32>
    %191 = arith.mulf %185, %189 : vector<8x128xf32>
    %192 = arith.addf %190, %191 : vector<8x128xf32>
    %193 = math.tanh %192 : vector<8x128xf32>
    %194 = arith.mulf %187, %193 : vector<8x128xf32>
    %c8_i32_43 = arith.constant 8 : i32
    %195 = arith.truncf %194 : vector<8x128xf32> to vector<8x128xbf16>
    %c0_44 = arith.constant 0 : index
    %c0_45 = arith.constant 0 : index
    %196 = vector.load %arg5[%c0_44, %c0_45] : memref<128x128xbf16, #tpu.memory_space<vmem>>, vector<128x128xbf16>
    %cst_46 = arith.constant dense<0.000000e+00> : vector<8x128xf32>
    %197 = tpu.matmul %195, %196, %cst_46 {dimension_numbers = #tpu.dot_dimension_numbers<[1], [0], [0], [1], [0, 0, 1, 1], [], []>} : vector<8x128xbf16>, vector<128x128xbf16>, vector<8x128xf32> -> vector<8x128xf32>
    %c0_47 = arith.constant 0 : index
    %c0_48 = arith.constant 0 : index
    %198 = vector.load %arg6[%c0_47, %c0_48] : memref<1x128xf32, #tpu.memory_space<vmem>>, vector<1x128xf32>
    %199 = vector.broadcast %198 : vector<1x128xf32> to vector<8x128xf32>
    %200 = arith.addf %197, %199 : vector<8x128xf32>
    %201 = arith.truncf %200 : vector<8x128xf32> to vector<8x128xbf16>
    %c0_49 = arith.constant 0 : index
    %c0_50 = arith.constant 0 : index
    %202 = vector.load %arg7[%c0_49, %c0_50] : memref<128x128xbf16, #tpu.memory_space<vmem>>, vector<128x128xbf16>
    %cst_51 = arith.constant dense<0.000000e+00> : vector<8x128xf32>
    %203 = tpu.matmul %201, %202, %cst_51 {dimension_numbers = #tpu.dot_dimension_numbers<[1], [0], [0], [1], [0, 0, 1, 1], [], []>} : vector<8x128xbf16>, vector<128x128xbf16>, vector<8x128xf32> -> vector<8x128xf32>
    %c0_52 = arith.constant 0 : index
    %c0_53 = arith.constant 0 : index
    %204 = vector.load %arg8[%c0_52, %c0_53] : memref<1x128xf32, #tpu.memory_space<vmem>>, vector<1x128xf32>
    %205 = vector.broadcast %204 : vector<1x128xf32> to vector<8x128xf32>
    %206 = arith.addf %203, %205 : vector<8x128xf32>
    %c0_54 = arith.constant 0 : index
    %c0_55 = arith.constant 0 : index
    %207 = vector.load %arg9[%c0_54, %c0_55] : memref<8x128xf32, #tpu.memory_space<vmem>>, vector<8x128xf32>
    tpu.vector_store %arg9[%c0_54, %c0_55], %206 {strides = array<i32>} : memref<8x128xf32, #tpu.memory_space<vmem>>, vector<8x128xf32>,
    return
  }
  func.func @transform_0(%arg0: i32) -> (i32, i32, i32) {
    %c0_i32 = arith.constant 0 : i32
    %c0_i32_0 = arith.constant 0 : i32
    %c0_i32_1 = arith.constant 0 : i32
    return %arg0, %c0_i32, %c0_i32_0 : i32, i32, i32
  }
  func.func @transform_1(%arg0: i32) -> (i32, i32) {
    %c0_i32 = arith.constant 0 : i32
    %c0_i32_0 = arith.constant 0 : i32
    %c0_i32_1 = arith.constant 0 : i32
    return %c0_i32, %c0_i32_0 : i32, i32
  }
  func.func @transform_2(%arg0: i32) -> (i32, i32) {
    %c0_i32 = arith.constant 0 : i32
    %c0_i32_0 = arith.constant 0 : i32
    %c0_i32_1 = arith.constant 0 : i32
    return %c0_i32, %c0_i32_0 : i32, i32
  }
  func.func @transform_3(%arg0: i32) -> (i32, i32) {
    %c0_i32 = arith.constant 0 : i32
    %c0_i32_0 = arith.constant 0 : i32
    %c0_i32_1 = arith.constant 0 : i32
    return %c0_i32, %c0_i32_0 : i32, i32
  }
  func.func @transform_4(%arg0: i32) -> (i32, i32) {
    %c0_i32 = arith.constant 0 : i32
    %c0_i32_0 = arith.constant 0 : i32
    %c0_i32_1 = arith.constant 0 : i32
    return %c0_i32, %c0_i32_0 : i32, i32
  }
  func.func @transform_5(%arg0: i32) -> (i32, i32) {
    %c0_i32 = arith.constant 0 : i32
    %c0_i32_0 = arith.constant 0 : i32
    %c0_i32_1 = arith.constant 0 : i32
    return %c0_i32, %c0_i32_0 : i32, i32
  }
  func.func @transform_6(%arg0: i32) -> (i32, i32) {
    %c0_i32 = arith.constant 0 : i32
    %c0_i32_0 = arith.constant 0 : i32
    %c0_i32_1 = arith.constant 0 : i32
    return %c0_i32, %c0_i32_0 : i32, i32
  }
  func.func @transform_7(%arg0: i32) -> (i32, i32) {
    %c0_i32 = arith.constant 0 : i32
    %c0_i32_0 = arith.constant 0 : i32
    %c0_i32_1 = arith.constant 0 : i32
    return %c0_i32, %c0_i32_0 : i32, i32
  }
  func.func @transform_8(%arg0: i32) -> (i32, i32) {
    %c0_i32 = arith.constant 0 : i32
    %c0_i32_0 = arith.constant 0 : i32
    return %arg0, %c0_i32 : i32, i32
  }
}

</mosaic_0001>

<llo_original>
// kernel: tpu_custom_call.1
$region0: #{tpu_custom_call.1}
  #allocation0 [shape = 'u32[]', space=smem, size = 0x4, offset = 0x4, fixed_abs, tag = 'smem constant byte address 0x4 - core index']
  #allocation1 [shape = 'u32[144,128]{1,0:T(1,128)}', space=vmem, size = 0x12000, scoped, tag = 'internal scratch']
  #allocation2 [shape = 'f32[64,512]{1,0:T(8,128)}', space=vmem, size = 0x20000, scoped, tag = 'scratch operand']
  %s0 = inlined_call_operand.hbm [shape: bf16[1,64,128], index: 0, kind: input, shape index: {}]
  %s1 = inlined_call_operand.hbm [shape: bf16[128,512], index: 1, kind: input, shape index: {}]
  %s2 = inlined_call_operand.vmem [shape: f32[1,512], index: 2, kind: input, shape index: {}]
  %s3 = inlined_call_operand.hbm [shape: bf16[128,512], index: 3, kind: input, shape index: {}]
  %s4 = inlined_call_operand.hbm [shape: bf16[128,128], index: 4, kind: input, shape index: {}]
  %s5 = inlined_call_operand.vmem [shape: f32[1,128], index: 5, kind: input, shape index: {}]
  %s6 = inlined_call_operand.hbm [shape: bf16[128,128], index: 6, kind: input, shape index: {}]
  %s7 = inlined_call_operand.vmem [shape: f32[1,128], index: 7, kind: input, shape index: {}]
  %s8 = inlined_call_operand.hbm [shape: f32[8,128], index: 8, kind: output, shape index: {}]
  %s9 = sld [smem:[#allocation0]]
  $region62: #{tpu_custom_call.1} parent=0
    _
  %s11 = ssub.s32 1, %s9
  %s12 = scalar_select 0, %s11, %s9
  $region1: #{tpu_custom_call.1} parent=0
    #allocation3 [shape = 'u8[16384]{0}', space=vmem, size = 0x4000, scoped, tag = 'input window, operand 0, single buffered']
    #allocation4 [shape = 's32[1]{0}', space=sflag, size = 0x4, scoped, tag = 'scoped memory for tpu_custom_call.1']
    #allocation5 [shape = 's32[1]{0}', space=sflag, size = 0x4, scoped, tag = 'scoped memory for tpu_custom_call.1']
    #allocation6 [shape = 'u8[131072]{0}', space=vmem, size = 0x20000, scoped, tag = 'input window, operand 1, single buffered']
    #allocation7 [shape = 's32[1]{0}', space=sflag, size = 0x4, scoped, tag = 'scoped memory for tpu_custom_call.1']
    #allocation8 [shape = 'u8[131072]{0}', space=vmem, size = 0x20000, scoped, tag = 'input window, operand 3, single buffered']
    #allocation9 [shape = 'u8[32768]{0}', space=vmem, size = 0x8000, scoped, tag = 'input window, operand 4, single buffered']
    #allocation10 [shape = 's32[1]{0}', space=sflag, size = 0x4, scoped, tag = 'scoped memory for tpu_custom_call.1']
    #allocation11 [shape = 'u8[32768]{0}', space=vmem, size = 0x8000, scoped, tag = 'input window, operand 6, single buffered']
    #allocation12 [shape = 'u8[4096]{0}', space=vmem, size = 0x1000, scoped, tag = 'output window, operand 0, single buffered']
    %13 = vsyncpa [#allocation4], 0
    %14 = vsyncpa [#allocation7], 0
    %15 = vsyncpa [#allocation10], 0
    %16 = vsyncpa [#allocation5], 0
    // Predicated region
    $region2: #{tpu_custom_call.1} parent=1 // pred_check
      _
    $region3: #{tpu_custom_call.1} parent=1 // pred_check_branch
      %18 = sbr.rel (0) target = $region5
    $region4: #{tpu_custom_call.1} parent=1 // pred_region
      %s20 = ssub.s32 512, 512
      %21 = vsyncadd [#allocation4], %s20
      %s22 = sshll.u32 [#allocation3], 4
      %s23 = int_to_ptr.vmem [resolvable:$true] %s22
      %28 = dma.hbm_to_vmem [thread:$0]  %s0, 512, %s23, [#allocation4], 64, 64, 4
    $region5: #{tpu_custom_call.1} parent=1 // pred_fallthru
      _
    // Predicated region
    $region6: #{tpu_custom_call.1} parent=1 // pred_check
      _
    $region7: #{tpu_custom_call.1} parent=1 // pred_check_branch
      %30 = sbr.rel (0) target = $region9
    $region8: #{tpu_custom_call.1} parent=1 // pred_region
      %s32 = ssub.s32 4096, 4096
      %33 = vsyncadd [#allocation7], %s32
      %s34 = sshll.u32 [#allocation6], 4
      %s35 = int_to_ptr.vmem [resolvable:$true] %s34
      %40 = dma.hbm_to_vmem [thread:$0]  %s1, 4096, %s35, [#allocation7], 256, 256, 16
    $region9: #{tpu_custom_call.1} parent=1 // pred_fallthru
      _
    // Predicated region
    $region10: #{tpu_custom_call.1} parent=1 // pred_check
      _
    $region11: #{tpu_custom_call.1} parent=1 // pred_check_branch
      %42 = sbr.rel (0) target = $region13
    $region12: #{tpu_custom_call.1} parent=1 // pred_region
      _
    $region13: #{tpu_custom_call.1} parent=1 // pred_fallthru
      _
    // Predicated region
    $region14: #{tpu_custom_call.1} parent=1 // pred_check
      _
    $region15: #{tpu_custom_call.1} parent=1 // pred_check_branch
      %44 = sbr.rel (0) target = $region17
    $region16: #{tpu_custom_call.1} parent=1 // pred_region
      %s46 = ssub.s32 4096, 4096
      %47 = vsyncadd [#allocation7], %s46
      %s48 = sshll.u32 [#allocation8], 4
      %s49 = int_to_ptr.vmem [resolvable:$true] %s48
      %54 = dma.hbm_to_vmem [thread:$0]  %s3, 4096, %s49, [#allocation7], 256, 256, 16
    $region17: #{tpu_custom_call.1} parent=1 // pred_fallthru
      _
    // Predicated region
    $region18: #{tpu_custom_call.1} parent=1 // pred_check
      _
    $region19: #{tpu_custom_call.1} parent=1 // pred_check_branch
      %56 = sbr.rel (0) target = $region21
    $region20: #{tpu_custom_call.1} parent=1 // pred_region
      %s58 = ssub.s32 1024, 1024
      %59 = vsyncadd [#allocation10], %s58
      %s60 = sshll.u32 [#allocation9], 4
      %s61 = int_to_ptr.vmem [resolvable:$true] %s60
      %66 = dma.hbm_to_vmem [thread:$0]  %s4, 1024, %s61, [#allocation10], 64, 64, 4
    $region21: #{tpu_custom_call.1} parent=1 // pred_fallthru
      _
    // Predicated region
    $region22: #{tpu_custom_call.1} parent=1 // pred_check
      _
    $region23: #{tpu_custom_call.1} parent=1 // pred_check_branch
      %68 = sbr.rel (0) target = $region25
    $region24: #{tpu_custom_call.1} parent=1 // pred_region
      _
    $region25: #{tpu_custom_call.1} parent=1 // pred_fallthru
      _
    // Predicated region
    $region26: #{tpu_custom_call.1} parent=1 // pred_check
      _
    $region27: #{tpu_custom_call.1} parent=1 // pred_check_branch
      %70 = sbr.rel (0) target = $region29
    $region28: #{tpu_custom_call.1} parent=1 // pred_region
      %s72 = ssub.s32 1024, 1024
      %73 = vsyncadd [#allocation10], %s72
      %s74 = sshll.u32 [#allocation11], 4
      %s75 = int_to_ptr.vmem [resolvable:$true] %s74
      %80 = dma.hbm_to_vmem [thread:$0]  %s6, 1024, %s75, [#allocation10], 64, 64, 4
    $region29: #{tpu_custom_call.1} parent=1 // pred_fallthru
      _
    // Predicated region
    $region30: #{tpu_custom_call.1} parent=1 // pred_check
      _
    $region31: #{tpu_custom_call.1} parent=1 // pred_check_branch
      %82 = sbr.rel (0) target = $region33
    $region32: #{tpu_custom_call.1} parent=1 // pred_region
      _
    $region33: #{tpu_custom_call.1} parent=1 // pred_fallthru
      _
    // Predicated region
    $region34: #{tpu_custom_call.1} parent=1 // pred_check
      _
    $region35: #{tpu_custom_call.1} parent=1 // pred_check_branch
      %84 = sbr.rel (0) target = $region37
    $region36: #{tpu_custom_call.1} parent=1 // pred_region
      %85 = dma.done [#allocation4], 512
    $region37: #{tpu_custom_call.1} parent=1 // pred_fallthru
      _
    // Predicated region
    $region38: #{tpu_custom_call.1} parent=1 // pred_check
      _
    $region39: #{tpu_custom_call.1} parent=1 // pred_check_branch
      %87 = sbr.rel (0) target = $region41
    $region40: #{tpu_custom_call.1} parent=1 // pred_region
      %88 = dma.done [#allocation7], 4096
    $region41: #{tpu_custom_call.1} parent=1 // pred_fallthru
      _
    // Predicated region
    $region42: #{tpu_custom_call.1} parent=1 // pred_check
      _
    $region43: #{tpu_custom_call.1} parent=1 // pred_check_branch
      %90 = sbr.rel (0) target = $region45
    $region44: #{tpu_custom_call.1} parent=1 // pred_region
      %91 = dma.done [#allocation7], 4096
    $region45: #{tpu_custom_call.1} parent=1 // pred_fallthru
      _
    // Predicated region
    $region46: #{tpu_custom_call.1} parent=1 // pred_check
      _
    $region47: #{tpu_custom_call.1} parent=1 // pred_check_branch
      %93 = sbr.rel (0) target = $region49
    $region48: #{tpu_custom_call.1} parent=1 // pred_region
      %94 = dma.done [#allocation10], 1024
    $region49: #{tpu_custom_call.1} parent=1 // pred_fallthru
      _
    // Predicated region
    $region50: #{tpu_custom_call.1} parent=1 // pred_check
      _
    $region51: #{tpu_custom_call.1} parent=1 // pred_check_branch
      %96 = sbr.rel (0) target = $region53
    $region52: #{tpu_custom_call.1} parent=1 // pred_region
      %97 = dma.done [#allocation10], 1024
    $region53: #{tpu_custom_call.1} parent=1 // pred_fallthru
      _
    %v99 = vld [vmem:[#allocation3] sm:$0xf]
    %v100 = vld [vmem:[#allocation3 + $0x4] sm:$0xf]
    %v101 = vld [vmem:[#allocation3 + $0x8] sm:$0xf]
    %v102 = vld [vmem:[#allocation3 + $0xc] sm:$0xf]
    %v103 = vld [vmem:[#allocation3 + $0x10] sm:$0xf]
    %v104 = vld [vmem:[#allocation3 + $0x14] sm:$0xf]
    %v105 = vld [vmem:[#allocation3 + $0x18] sm:$0xf]
    %v106 = vld [vmem:[#allocation3 + $0x1c] sm:$0xf]
    %v107 = vld [vmem:[#allocation6] sm:$0xff]
    %v108 = vld [vmem:[#allocation6 + $0x8] sm:$0xff]
    %v109 = vld [vmem:[#allocation6 + $0x10] sm:$0xff]
    %v110 = vld [vmem:[#allocation6 + $0x18] sm:$0xff]
    %v111 = vld [vmem:[#allocation6 + $0x20] sm:$0xff]
    %v112 = vld [vmem:[#allocation6 + $0x28] sm:$0xff]
    %v113 = vld [vmem:[#allocation6 + $0x30] sm:$0xff]
    %v114 = vld [vmem:[#allocation6 + $0x38] sm:$0xff]
    %v115 = vld [vmem:[#allocation6 + $0x40] sm:$0xff]
    %v116 = vld [vmem:[#allocation6 + $0x48] sm:$0xff]
    %v117 = vld [vmem:[#allocation6 + $0x50] sm:$0xff]
    %v118 = vld [vmem:[#allocation6 + $0x58] sm:$0xff]
    %v119 = vld [vmem:[#allocation6 + $0x60] sm:$0xff]
    %v120 = vld [vmem:[#allocation6 + $0x68] sm:$0xff]
    %v121 = vld [vmem:[#allocation6 + $0x70] sm:$0xff]
    %v122 = vld [vmem:[#allocation6 + $0x78] sm:$0xff]
    %v123 = vld [vmem:[#allocation6 + $0x80] sm:$0xff]
    %v124 = vld [vmem:[#allocation6 + $0x88] sm:$0xff]
    %v125 = vld [vmem:[#allocation6 + $0x90] sm:$0xff]
    %v126 = vld [vmem:[#allocation6 + $0x98] sm:$0xff]
    %v127 = vld [vmem:[#allocation6 + $0xa0] sm:$0xff]
    %v128 = vld [vmem:[#allocation6 + $0xa8] sm:$0xff]
    %v129 = vld [vmem:[#allocation6 + $0xb0] sm:$0xff]
    %v130 = vld [vmem:[#allocation6 + $0xb8] sm:$0xff]
    %v131 = vld [vmem:[#allocation6 + $0xc0] sm:$0xff]
    %v132 = vld [vmem:[#allocation6 + $0xc8] sm:$0xff]
    %v133 = vld [vmem:[#allocation6 + $0xd0] sm:$0xff]
    %v134 = vld [vmem:[#allocation6 + $0xd8] sm:$0xff]
    %v135 = vld [vmem:[#allocation6 + $0xe0] sm:$0xff]
    %v136 = vld [vmem:[#allocation6 + $0xe8] sm:$0xff]
    %v137 = vld [vmem:[#allocation6 + $0xf0] sm:$0xff]
    %v138 = vld [vmem:[#allocation6 + $0xf8] sm:$0xff]
    %v139 = vld [vmem:[%s2] sm:$0xf]
    %v141 = vlaneseq
    %v142 = vshrl.u32 %v141, 7
    %v143 = vsub.s32 0, %v142
    %v144 = vrot.slane %v139, %v143
    %v145 = vlaneseq
    %v146 = vshrl.u32 %v145, 7
    %v147 = vsub.s32 1, %v146
    %v148 = vrot.slane %v139, %v147
    %v149 = vlaneseq
    %v150 = vshrl.u32 %v149, 7
    %v151 = vsub.s32 2, %v150
    %v152 = vrot.slane %v139, %v151
    %v153 = vlaneseq
    %v154 = vshrl.u32 %v153, 7
    %v155 = vsub.s32 3, %v154
    %v156 = vrot.slane %v139, %v155
    %v169 = vunpack.c.l.b16 %v99
    %v170 = vunpack.c.l.b16 %v100
    %v171 = vunpack.c.l.b16 %v101
    %v172 = vunpack.c.l.b16 %v102
    %v173 = vunpack.c.l.b16 %v103
    %v174 = vunpack.c.l.b16 %v104
    %v175 = vunpack.c.l.b16 %v105
    %v176 = vunpack.c.l.b16 %v106
    %v177 = vpack.c.b16 %v170, %v169
    %v178 = vpack.c.b16 %v172, %v171
    %v179 = vpack.c.b16 %v174, %v173
    %v180 = vpack.c.b16 %v176, %v175
    %v217 = vunpack.c.l.b16 %v107
    %v218 = vunpack.c.h.b16 %v107
    %v219 = vunpack.c.l.b16 %v108
    %v220 = vunpack.c.h.b16 %v108
    %v221 = vunpack.c.l.b16 %v109
    %v222 = vunpack.c.h.b16 %v109
    %v223 = vunpack.c.l.b16 %v110
    %v224 = vunpack.c.h.b16 %v110
    %v225 = vunpack.c.l.b16 %v111
    %v226 = vunpack.c.h.b16 %v111
    %v227 = vunpack.c.l.b16 %v112
    %v228 = vunpack.c.h.b16 %v112
    %v229 = vunpack.c.l.b16 %v113
    %v230 = vunpack.c.h.b16 %v113
    %v231 = vunpack.c.l.b16 %v114
    %v232 = vunpack.c.h.b16 %v114
    %v233 = vunpack.c.l.b16 %v115
    %v234 = vunpack.c.h.b16 %v115
    %v235 = vunpack.c.l.b16 %v116
    %v236 = vunpack.c.h.b16 %v116
    %v237 = vunpack.c.l.b16 %v117
    %v238 = vunpack.c.h.b16 %v117
    %v239 = vunpack.c.l.b16 %v118
    %v240 = vunpack.c.h.b16 %v118
    %v241 = vunpack.c.l.b16 %v119
    %v242 = vunpack.c.h.b16 %v119
    %v243 = vunpack.c.l.b16 %v120
    %v244 = vunpack.c.h.b16 %v120
    %v245 = vunpack.c.l.b16 %v121
    %v246 = vunpack.c.h.b16 %v121
    %v247 = vunpack.c.l.b16 %v122
    %v248 = vunpack.c.h.b16 %v122
    %v249 = vunpack.c.l.b16 %v123
    %v250 = vunpack.c.h.b16 %v123
    %v251 = vunpack.c.l.b16 %v124
    %v252 = vunpack.c.h.b16 %v124
    %v253 = vunpack.c.l.b16 %v125
    %v254 = vunpack.c.h.b16 %v125
    %v255 = vunpack.c.l.b16 %v126
    %v256 = vunpack.c.h.b16 %v126
    %v257 = vunpack.c.l.b16 %v127
    %v258 = vunpack.c.h.b16 %v127
    %v259 = vunpack.c.l.b16 %v128
    %v260 = vunpack.c.h.b16 %v128
    %v261 = vunpack.c.l.b16 %v129
    %v262 = vunpack.c.h.b16 %v129
    %v263 = vunpack.c.l.b16 %v130
    %v264 = vunpack.c.h.b16 %v130
    %v265 = vunpack.c.l.b16 %v131
    %v266 = vunpack.c.h.b16 %v131
    %v267 = vunpack.c.l.b16 %v132
    %v268 = vunpack.c.h.b16 %v132
    %v269 = vunpack.c.l.b16 %v133
    %v270 = vunpack.c.h.b16 %v133
    %v271 = vunpack.c.l.b16 %v134
    %v272 = vunpack.c.h.b16 %v134
    %v273 = vunpack.c.l.b16 %v135
    %v274 = vunpack.c.h.b16 %v135
    %v275 = vunpack.c.l.b16 %v136
    %v276 = vunpack.c.h.b16 %v136
    %v277 = vunpack.c.l.b16 %v137
    %v278 = vunpack.c.h.b16 %v137
    %v279 = vunpack.c.l.b16 %v138
    %v280 = vunpack.c.h.b16 %v138
    %v281 = vpack.c.b16 %v221, %v217
    %v282 = vpack.c.b16 %v222, %v218
    %v283 = vpack.c.b16 %v223, %v219
    %v284 = vpack.c.b16 %v224, %v220
    %v285 = vpack.c.b16 %v229, %v225
    %v286 = vpack.c.b16 %v230, %v226
    %v287 = vpack.c.b16 %v231, %v227
    %v288 = vpack.c.b16 %v232, %v228
    %v289 = vpack.c.b16 %v237, %v233
    %v290 = vpack.c.b16 %v238, %v234
    %v291 = vpack.c.b16 %v239, %v235
    %v292 = vpack.c.b16 %v240, %v236
    %v293 = vpack.c.b16 %v245, %v241
    %v294 = vpack.c.b16 %v246, %v242
    %v295 = vpack.c.b16 %v247, %v243
    %v296 = vpack.c.b16 %v248, %v244
    %v297 = vpack.c.b16 %v253, %v249
    %v298 = vpack.c.b16 %v254, %v250
    %v299 = vpack.c.b16 %v255, %v251
    %v300 = vpack.c.b16 %v256, %v252
    %v301 = vpack.c.b16 %v261, %v257
    %v302 = vpack.c.b16 %v262, %v258
    %v303 = vpack.c.b16 %v263, %v259
    %v304 = vpack.c.b16 %v264, %v260
    %v305 = vpack.c.b16 %v269, %v265
    %v306 = vpack.c.b16 %v270, %v266
    %v307 = vpack.c.b16 %v271, %v267
    %v308 = vpack.c.b16 %v272, %v268
    %v309 = vpack.c.b16 %v277, %v273
    %v310 = vpack.c.b16 %v278, %v274
    %v311 = vpack.c.b16 %v279, %v275
    %v312 = vpack.c.b16 %v280, %v276
    %345 = vmatprep.subr.bf16.mxu0 %v282
    %346 = vmatpush1.bf16.msra.mxu0 %v281
    %347 = vmatprep.subr.bf16.mxu0 %v286
    %348 = vmatpush1.bf16.msra.mxu0 %v285
    %349 = vmatprep.subr.bf16.mxu0 %v290
    %350 = vmatpush1.bf16.msra.mxu0 %v289
    %351 = vmatprep.subr.bf16.mxu0 %v294
    %352 = vmatpush1.bf16.msra.mxu0 %v293
    %353 = vmatprep.subr.bf16.mxu0 %v298
    %354 = vmatpush1.bf16.msra.mxu0 %v297
    %355 = vmatprep.subr.bf16.mxu0 %v302
    %356 = vmatpush1.bf16.msra.mxu0 %v301
    %357 = vmatprep.subr.bf16.mxu0 %v306
    %358 = vmatpush1.bf16.msra.mxu0 %v305
    %359 = vmatprep.subr.bf16.mxu0 %v310
    %360 = vmatpush1.bf16.msra.mxu0 %v309
    %361 = vmatprep.subr.bf16.mxu0 0
    %362 = vmatpush1.bf16.msra.mxu0 0
    %363 = vmatprep.subr.bf16.mxu0 0
    %364 = vmatpush1.bf16.msra.mxu0 0
    %365 = vmatprep.subr.bf16.mxu0 0
    %366 = vmatpush1.bf16.msra.mxu0 0
    %367 = vmatprep.subr.bf16.mxu0 0
    %368 = vmatpush1.bf16.msra.mxu0 0
    %369 = vmatprep.subr.bf16.mxu0 0
    %370 = vmatpush1.bf16.msra.mxu0 0
    %371 = vmatprep.subr.bf16.mxu0 0
    %372 = vmatpush1.bf16.msra.mxu0 0
    %373 = vmatprep.subr.bf16.mxu0 0
    %374 = vmatpush1.bf16.msra.mxu0 0
    %375 = vmatprep.subr.bf16.mxu0 0
    %376 = vmatpush1.bf16.msra.mxu0 0
    %377 = vmatprep.mubr.bf16.mxu0 0
    %378 = vmatmul.mubr.bf16.gmra.mrb[0].mxu0 %v177
    %v379 = vpop.f32.mrb[0].mxu0
    %v380 = vadd.f32 %v144, %v379
    %v381 = vpop.f32.mrb[0].mxu0
    %v382 = vadd.f32 %v148, %v381
    %v383 = vpop.f32.mrb[0].mxu0
    %v384 = vadd.f32 %v144, %v383
    %v385 = vpop.f32.mrb[0].mxu0
    %v386 = vadd.f32 %v148, %v385
    %387 = vmatprep.mubr.bf16.mxu0 0
    %388 = vmatmul.mubr.bf16.gmra.mrb[0].mxu0 %v178
    %v389 = vpop.f32.mrb[0].mxu0
    %v390 = vadd.f32 %v144, %v389
    %v391 = vpop.f32.mrb[0].mxu0
    %v392 = vadd.f32 %v148, %v391
    %v393 = vpop.f32.mrb[0].mxu0
    %v394 = vadd.f32 %v144, %v393
    %v395 = vpop.f32.mrb[0].mxu0
    %v396 = vadd.f32 %v148, %v395
    %397 = vmatprep.mubr.bf16.mxu0 0
    %398 = vmatmul.mubr.bf16.gmra.mrb[0].mxu0 %v179
    %v399 = vpop.f32.mrb[0].mxu0
    %v400 = vadd.f32 %v144, %v399
    %v401 = vpop.f32.mrb[0].mxu0
    %v402 = vadd.f32 %v148, %v401
    %v403 = vpop.f32.mrb[0].mxu0
    %v404 = vadd.f32 %v144, %v403
    %v405 = vpop.f32.mrb[0].mxu0
    %v406 = vadd.f32 %v148, %v405
    %407 = vmatprep.mubr.bf16.mxu0 0
    %408 = vmatmul.mubr.bf16.gmra.mrb[0].mxu0 %v180
    %v409 = vpop.f32.mrb[0].mxu0
    %v410 = vadd.f32 %v144, %v409
    %v411 = vpop.f32.mrb[0].mxu0
    %v412 = vadd.f32 %v148, %v411
    %v413 = vpop.f32.mrb[0].mxu0
    %v414 = vadd.f32 %v144, %v413
    %v415 = vpop.f32.mrb[0].mxu0
    %v416 = vadd.f32 %v148, %v415
    %417 = vdwg.mxu0
    %418 = vmatprep.subr.bf16.mxu0 %v284
    %419 = vmatpush1.bf16.msra.mxu0 %v283
    %420 = vmatprep.subr.bf16.mxu0 %v288
    %421 = vmatpush1.bf16.msra.mxu0 %v287
    %422 = vmatprep.subr.bf16.mxu0 %v292
    %423 = vmatpush1.bf16.msra.mxu0 %v291
    %424 = vmatprep.subr.bf16.mxu0 %v296
    %425 = vmatpush1.bf16.msra.mxu0 %v295
    %426 = vmatprep.subr.bf16.mxu0 %v300
    %427 = vmatpush1.bf16.msra.mxu0 %v299
    %428 = vmatprep.subr.bf16.mxu0 %v304
    %429 = vmatpush1.bf16.msra.mxu0 %v303
    %430 = vmatprep.subr.bf16.mxu0 %v308
    %431 = vmatpush1.bf16.msra.mxu0 %v307
    %432 = vmatprep.subr.bf16.mxu0 %v312
    %433 = vmatpush1.bf16.msra.mxu0 %v311
    %434 = vmatprep.subr.bf16.mxu0 0
    %435 = vmatpush1.bf16.msra.mxu0 0
    %436 = vmatprep.subr.bf16.mxu0 0
    %437 = vmatpush1.bf16.msra.mxu0 0
    %438 = vmatprep.subr.bf16.mxu0 0
    %439 = vmatpush1.bf16.msra.mxu0 0
    %440 = vmatprep.subr.bf16.mxu0 0
    %441 = vmatpush1.bf16.msra.mxu0 0
    %442 = vmatprep.subr.bf16.mxu0 0
    %443 = vmatpush1.bf16.msra.mxu0 0
    %444 = vmatprep.subr.bf16.mxu0 0
    %445 = vmatpush1.bf16.msra.mxu0 0
    %446 = vmatprep.subr.bf16.mxu0 0
    %447 = vmatpush1.bf16.msra.mxu0 0
    %448 = vmatprep.subr.bf16.mxu0 0
    %449 = vmatpush1.bf16.msra.mxu0 0
    %450 = vmatprep.mubr.bf16.mxu0 0
    %451 = vmatmul.mubr.bf16.gmra.mrb[0].mxu0 %v177
    %v452 = vpop.f32.mrb[0].mxu0
    %v453 = vadd.f32 %v152, %v452
    %v454 = vpop.f32.mrb[0].mxu0
    %v455 = vadd.f32 %v156, %v454
    %v456 = vpop.f32.mrb[0].mxu0
    %v457 = vadd.f32 %v152, %v456
    %v458 = vpop.f32.mrb[0].mxu0
    %v459 = vadd.f32 %v156, %v458
    %460 = vmatprep.mubr.bf16.mxu0 0
    %461 = vmatmul.mubr.bf16.gmra.mrb[0].mxu0 %v178
    %v462 = vpop.f32.mrb[0].mxu0
    %v463 = vadd.f32 %v152, %v462
    %v464 = vpop.f32.mrb[0].mxu0
    %v465 = vadd.f32 %v156, %v464
    %v466 = vpop.f32.mrb[0].mxu0
    %v467 = vadd.f32 %v152, %v466
    %v468 = vpop.f32.mrb[0].mxu0
    %v469 = vadd.f32 %v156, %v468
    %470 = vmatprep.mubr.bf16.mxu0 0
    %471 = vmatmul.mubr.bf16.gmra.mrb[0].mxu0 %v179
    %v472 = vpop.f32.mrb[0].mxu0
    %v473 = vadd.f32 %v152, %v472
    %v474 = vpop.f32.mrb[0].mxu0
    %v475 = vadd.f32 %v156, %v474
    %v476 = vpop.f32.mrb[0].mxu0
    %v477 = vadd.f32 %v152, %v476
    %v478 = vpop.f32.mrb[0].mxu0
    %v479 = vadd.f32 %v156, %v478
    %480 = vmatprep.mubr.bf16.mxu0 0
    %481 = vmatmul.mubr.bf16.gmra.mrb[0].mxu0 %v180
    %v482 = vpop.f32.mrb[0].mxu0
    %v483 = vadd.f32 %v152, %v482
    %v484 = vpop.f32.mrb[0].mxu0
    %v485 = vadd.f32 %v156, %v484
    %v486 = vpop.f32.mrb[0].mxu0
    %v487 = vadd.f32 %v152, %v486
    %v488 = vpop.f32.mrb[0].mxu0
    %v489 = vadd.f32 %v156, %v488
    %490 = vdwg.mxu0
    %491 = vst [vmem:[#allocation2] sm:$0xff] %v380
    %492 = vst [vmem:[#allocation2 + $0x8] sm:$0xff] %v382
    %493 = vst [vmem:[#allocation2 + $0x10] sm:$0xff] %v453
    %494 = vst [vmem:[#allocation2 + $0x18] sm:$0xff] %v455
    %495 = vst [vmem:[#allocation2 + $0x20] sm:$0xff] %v384
    %496 = vst [vmem:[#allocation2 + $0x28] sm:$0xff] %v386
    %497 = vst [vmem:[#allocation2 + $0x30] sm:$0xff] %v457
    %498 = vst [vmem:[#allocation2 + $0x38] sm:$0xff] %v459
    %499 = vst [vmem:[#allocation2 + $0x40] sm:$0xff] %v390
    %500 = vst [vmem:[#allocation2 + $0x48] sm:$0xff] %v392
    %501 = vst [vmem:[#allocation2 + $0x50] sm:$0xff] %v463
    %502 = vst [vmem:[#allocation2 + $0x58] sm:$0xff] %v465
    %503 = vst [vmem:[#allocation2 + $0x60] sm:$0xff] %v394
    %504 = vst [vmem:[#allocation2 + $0x68] sm:$0xff] %v396
    %505 = vst [vmem:[#allocation2 + $0x70] sm:$0xff] %v467
    %506 = vst [vmem:[#allocation2 + $0x78] sm:$0xff] %v469
    %507 = vst [vmem:[#allocation2 + $0x80] sm:$0xff] %v400
    %508 = vst [vmem:[#allocation2 + $0x88] sm:$0xff] %v402
    %509 = vst [vmem:[#allocation2 + $0x90] sm:$0xff] %v473
    %510 = vst [vmem:[#allocation2 + $0x98] sm:$0xff] %v475
    %511 = vst [vmem:[#allocation2 + $0xa0] sm:$0xff] %v404
    %512 = vst [vmem:[#allocation2 + $0xa8] sm:$0xff] %v406
    %513 = vst [vmem:[#allocation2 + $0xb0] sm:$0xff] %v477
    %514 = vst [vmem:[#allocation2 + $0xb8] sm:$0xff] %v479
    %515 = vst [vmem:[#allocation2 + $0xc0] sm:$0xff] %v410
    %516 = vst [vmem:[#allocation2 + $0xc8] sm:$0xff] %v412
    %517 = vst [vmem:[#allocation2 + $0xd0] sm:$0xff] %v483
    %518 = vst [vmem:[#allocation2 + $0xd8] sm:$0xff] %v485
    %519 = vst [vmem:[#allocation2 + $0xe0] sm:$0xff] %v414
    %520 = vst [vmem:[#allocation2 + $0xe8] sm:$0xff] %v416
    %521 = vst [vmem:[#allocation2 + $0xf0] sm:$0xff] %v487
    %522 = vst [vmem:[#allocation2 + $0xf8] sm:$0xff] %v489
    %v523 = vld [vmem:[#allocation8] sm:$0xff]
    %v524 = vld [vmem:[#allocation8 + $0x8] sm:$0xff]
    %v525 = vld [vmem:[#allocation8 + $0x10] sm:$0xff]
    %v526 = vld [vmem:[#allocation8 + $0x18] sm:$0xff]
    %v527 = vld [vmem:[#allocation8 + $0x20] sm:$0xff]
    %v528 = vld [vmem:[#allocation8 + $0x28] sm:$0xff]
    %v529 = vld [vmem:[#allocation8 + $0x30] sm:$0xff]
    %v530 = vld [vmem:[#allocation8 + $0x38] sm:$0xff]
    %v531 = vld [vmem:[#allocation8 + $0x40] sm:$0xff]
    %v532 = vld [vmem:[#allocation8 + $0x48] sm:$0xff]
    %v533 = vld [vmem:[#allocation8 + $0x50] sm:$0xff]
    %v534 = vld [vmem:[#allocation8 + $0x58] sm:$0xff]
    %v535 = vld [vmem:[#allocation8 + $0x60] sm:$0xff]
    %v536 = vld [vmem:[#allocation8 + $0x68] sm:$0xff]
    %v537 = vld [vmem:[#allocation8 + $0x70] sm:$0xff]
    %v538 = vld [vmem:[#allocation8 + $0x78] sm:$0xff]
    %v539 = vld [vmem:[#allocation8 + $0x80] sm:$0xff]
    %v540 = vld [vmem:[#allocation8 + $0x88] sm:$0xff]
    %v541 = vld [vmem:[#allocation8 + $0x90] sm:$0xff]
    %v542 = vld [vmem:[#allocation8 + $0x98] sm:$0xff]
    %v543 = vld [vmem:[#allocation8 + $0xa0] sm:$0xff]
    %v544 = vld [vmem:[#allocation8 + $0xa8] sm:$0xff]
    %v545 = vld [vmem:[#allocation8 + $0xb0] sm:$0xff]
    %v546 = vld [vmem:[#allocation8 + $0xb8] sm:$0xff]
    %v547 = vld [vmem:[#allocation8 + $0xc0] sm:$0xff]
    %v548 = vld [vmem:[#allocation8 + $0xc8] sm:$0xff]
    %v549 = vld [vmem:[#allocation8 + $0xd0] sm:$0xff]
    %v550 = vld [vmem:[#allocation8 + $0xd8] sm:$0xff]
    %v551 = vld [vmem:[#allocation8 + $0xe0] sm:$0xff]
    %v552 = vld [vmem:[#allocation8 + $0xe8] sm:$0xff]
    %v553 = vld [vmem:[#allocation8 + $0xf0] sm:$0xff]
    %v554 = vld [vmem:[#allocation8 + $0xf8] sm:$0xff]
    %s555 = smul.u32 0, 4
    %s556 = smul.addr %s555, 8
    %s557 = scalar_lea.vmem [#allocation2], %s556
    %v558 = vld [vmem:[%s557] sm:$0xff]
    %v559 = vld [vmem:[%s557 + $0x8] sm:$0xff]
    %v560 = vld [vmem:[%s557 + $0x10] sm:$0xff]
    %v561 = vld [vmem:[%s557 + $0x18] sm:$0xff]
    %v594 = vunpack.c.l.b16 %v523
    %v595 = vunpack.c.h.b16 %v523
    %v596 = vunpack.c.l.b16 %v524
    %v597 = vunpack.c.h.b16 %v524
    %v598 = vunpack.c.l.b16 %v525
    %v599 = vunpack.c.h.b16 %v525
    %v600 = vunpack.c.l.b16 %v526
    %v601 = vunpack.c.h.b16 %v526
    %v602 = vunpack.c.l.b16 %v527
    %v603 = vunpack.c.h.b16 %v527
    %v604 = vunpack.c.l.b16 %v528
    %v605 = vunpack.c.h.b16 %v528
    %v606 = vunpack.c.l.b16 %v529
    %v607 = vunpack.c.h.b16 %v529
    %v608 = vunpack.c.l.b16 %v530
    %v609 = vunpack.c.h.b16 %v530
    %v610 = vunpack.c.l.b16 %v531
    %v611 = vunpack.c.h.b16 %v531
    %v612 = vunpack.c.l.b16 %v532
    %v613 = vunpack.c.h.b16 %v532
    %v614 = vunpack.c.l.b16 %v533
    %v615 = vunpack.c.h.b16 %v533
    %v616 = vunpack.c.l.b16 %v534
    %v617 = vunpack.c.h.b16 %v534
    %v618 = vunpack.c.l.b16 %v535
    %v619 = vunpack.c.h.b16 %v535
    %v620 = vunpack.c.l.b16 %v536
    %v621 = vunpack.c.h.b16 %v536
    %v622 = vunpack.c.l.b16 %v537
    %v623 = vunpack.c.h.b16 %v537
    %v624 = vunpack.c.l.b16 %v538
    %v625 = vunpack.c.h.b16 %v538
    %v626 = vunpack.c.l.b16 %v539
    %v627 = vunpack.c.h.b16 %v539
    %v628 = vunpack.c.l.b16 %v540
    %v629 = vunpack.c.h.b16 %v540
    %v630 = vunpack.c.l.b16 %v541
    %v631 = vunpack.c.h.b16 %v541
    %v632 = vunpack.c.l.b16 %v542
    %v633 = vunpack.c.h.b16 %v542
    %v634 = vunpack.c.l.b16 %v543
    %v635 = vunpack.c.h.b16 %v543
    %v636 = vunpack.c.l.b16 %v544
    %v637 = vunpack.c.h.b16 %v544
    %v638 = vunpack.c.l.b16 %v545
    %v639 = vunpack.c.h.b16 %v545
    %v640 = vunpack.c.l.b16 %v546
    %v641 = vunpack.c.h.b16 %v546
    %v642 = vunpack.c.l.b16 %v547
    %v643 = vunpack.c.h.b16 %v547
    %v644 = vunpack.c.l.b16 %v548
    %v645 = vunpack.c.h.b16 %v548
    %v646 = vunpack.c.l.b16 %v549
    %v647 = vunpack.c.h.b16 %v549
    %v648 = vunpack.c.l.b16 %v550
    %v649 = vunpack.c.h.b16 %v550
    %v650 = vunpack.c.l.b16 %v551
    %v651 = vunpack.c.h.b16 %v551
    %v652 = vunpack.c.l.b16 %v552
    %v653 = vunpack.c.h.b16 %v552
    %v654 = vunpack.c.l.b16 %v553
    %v655 = vunpack.c.h.b16 %v553
    %v656 = vunpack.c.l.b16 %v554
    %v657 = vunpack.c.h.b16 %v554
    %v658 = vpack.c.b16 %v598, %v594
    %v659 = vpack.c.b16 %v599, %v595
    %v660 = vpack.c.b16 %v600, %v596
    %v661 = vpack.c.b16 %v601, %v597
    %v662 = vpack.c.b16 %v606, %v602
    %v663 = vpack.c.b16 %v607, %v603
    %v664 = vpack.c.b16 %v608, %v604
    %v665 = vpack.c.b16 %v609, %v605
    %v666 = vpack.c.b16 %v614, %v610
    %v667 = vpack.c.b16 %v615, %v611
    %v668 = vpack.c.b16 %v616, %v612
    %v669 = vpack.c.b16 %v617, %v613
    %v670 = vpack.c.b16 %v622, %v618
    %v671 = vpack.c.b16 %v623, %v619
    %v672 = vpack.c.b16 %v624, %v620
    %v673 = vpack.c.b16 %v625, %v621
    %v674 = vpack.c.b16 %v630, %v626
    %v675 = vpack.c.b16 %v631, %v627
    %v676 = vpack.c.b16 %v632, %v628
    %v677 = vpack.c.b16 %v633, %v629
    %v678 = vpack.c.b16 %v638, %v634
    %v679 = vpack.c.b16 %v639, %v635
    %v680 = vpack.c.b16 %v640, %v636
    %v681 = vpack.c.b16 %v641, %v637
    %v682 = vpack.c.b16 %v646, %v642
    %v683 = vpack.c.b16 %v647, %v643
    %v684 = vpack.c.b16 %v648, %v644
    %v685 = vpack.c.b16 %v649, %v645
    %v686 = vpack.c.b16 %v654, %v650
    %v687 = vpack.c.b16 %v655, %v651
    %v688 = vpack.c.b16 %v656, %v652
    %v689 = vpack.c.b16 %v657, %v653
    %722 = vmatprep.subr.bf16.mxu0 %v659
    %723 = vmatpush1.bf16.msra.mxu0 %v658
    %724 = vmatprep.subr.bf16.mxu0 %v663
    %725 = vmatpush1.bf16.msra.mxu0 %v662
    %726 = vmatprep.subr.bf16.mxu0 %v667
    %727 = vmatpush1.bf16.msra.mxu0 %v666
    %728 = vmatprep.subr.bf16.mxu0 %v671
    %729 = vmatpush1.bf16.msra.mxu0 %v670
    %730 = vmatprep.subr.bf16.mxu0 %v675
    %731 = vmatpush1.bf16.msra.mxu0 %v674
    %732 = vmatprep.subr.bf16.mxu0 %v679
    %733 = vmatpush1.bf16.msra.mxu0 %v678
    %734 = vmatprep.subr.bf16.mxu0 %v683
    %735 = vmatpush1.bf16.msra.mxu0 %v682
    %736 = vmatprep.subr.bf16.mxu0 %v687
    %737 = vmatpush1.bf16.msra.mxu0 %v686
    %738 = vmatprep.subr.bf16.mxu0 0
    %739 = vmatpush1.bf16.msra.mxu0 0
    %740 = vmatprep.subr.bf16.mxu0 0
    %741 = vmatpush1.bf16.msra.mxu0 0
    %742 = vmatprep.subr.bf16.mxu0 0
    %743 = vmatpush1.bf16.msra.mxu0 0
    %744 = vmatprep.subr.bf16.mxu0 0
    %745 = vmatpush1.bf16.msra.mxu0 0
    %746 = vmatprep.subr.bf16.mxu0 0
    %747 = vmatpush1.bf16.msra.mxu0 0
    %748 = vmatprep.subr.bf16.mxu0 0
    %749 = vmatpush1.bf16.msra.mxu0 0
    %750 = vmatprep.subr.bf16.mxu0 0
    %751 = vmatpush1.bf16.msra.mxu0 0
    %752 = vmatprep.subr.bf16.mxu0 0
    %753 = vmatpush1.bf16.msra.mxu0 0
    %754 = vmatprep.mubr.bf16.mxu0 0
    %755 = vmatmul.mubr.bf16.gmra.mrb[0].mxu0 0
    %v756 = vpop.f32.mrb[0].mxu0
    %v757 = vadd.f32 0.0, %v756
    %v758 = vpop.f32.mrb[0].mxu0
    %v759 = vadd.f32 0.0, %v758
    %v760 = vpop.f32.mrb[0].mxu0
    %v761 = vpop.f32.mrb[0].mxu0
    %762 = vdwg.mxu0
    %763 = vmatprep.subr.bf16.mxu0 %v661
    %764 = vmatpush1.bf16.msra.mxu0 %v660
    %765 = vmatprep.subr.bf16.mxu0 %v665
    %766 = vmatpush1.bf16.msra.mxu0 %v664
    %767 = vmatprep.subr.bf16.mxu0 %v669
    %768 = vmatpush1.bf16.msra.mxu0 %v668
    %769 = vmatprep.subr.bf16.mxu0 %v673
    %770 = vmatpush1.bf16.msra.mxu0 %v672
    %771 = vmatprep.subr.bf16.mxu0 %v677
    %772 = vmatpush1.bf16.msra.mxu0 %v676
    %773 = vmatprep.subr.bf16.mxu0 %v681
    %774 = vmatpush1.bf16.msra.mxu0 %v680
    %775 = vmatprep.subr.bf16.mxu0 %v685
    %776 = vmatpush1.bf16.msra.mxu0 %v684
    %777 = vmatprep.subr.bf16.mxu0 %v689
    %778 = vmatpush1.bf16.msra.mxu0 %v688
    %779 = vmatprep.subr.bf16.mxu0 0
    %780 = vmatpush1.bf16.msra.mxu0 0
    %781 = vmatprep.subr.bf16.mxu0 0
    %782 = vmatpush1.bf16.msra.mxu0 0
    %783 = vmatprep.subr.bf16.mxu0 0
    %784 = vmatpush1.bf16.msra.mxu0 0
    %785 = vmatprep.subr.bf16.mxu0 0
    %786 = vmatpush1.bf16.msra.mxu0 0
    %787 = vmatprep.subr.bf16.mxu0 0
    %788 = vmatpush1.bf16.msra.mxu0 0
    %789 = vmatprep.subr.bf16.mxu0 0
    %790 = vmatpush1.bf16.msra.mxu0 0
    %791 = vmatprep.subr.bf16.mxu0 0
    %792 = vmatpush1.bf16.msra.mxu0 0
    %793 = vmatprep.subr.bf16.mxu0 0
    %794 = vmatpush1.bf16.msra.mxu0 0
    %795 = vmatprep.mubr.bf16.mxu0 0
    %796 = vmatmul.mubr.bf16.gmra.mrb[0].mxu0 0
    %v797 = vpop.f32.mrb[0].mxu0
    %v798 = vadd.f32 0.0, %v797
    %v799 = vpop.f32.mrb[0].mxu0
    %v800 = vadd.f32 0.0, %v799
    %v801 = vpop.f32.mrb[0].mxu0
    %v802 = vpop.f32.mrb[0].mxu0
    %803 = vdwg.mxu0
    %v804 = vadd.f32 %v558, %v757
    %v805 = vadd.f32 %v559, %v759
    %v806 = vadd.f32 %v560, %v798
    %v807 = vadd.f32 %v561, %v800
    %v808 = vxor.u32 %v804, 2147483648
    %v809 = vxor.u32 %v805, 2147483648
    %v810 = vxor.u32 %v806, 2147483648
    %v811 = vmul.f32 %v808, 1.442695
    %v812 = vpow.pop %v811
    %v813 = vmul.f32 %v809, 1.442695
    %v814 = vpow.pop %v813
    %v815 = vmul.f32 %v810, 1.442695
    %v816 = vpow.pop %v815
    %v817 = vadd.f32 %v812, 1.0
    %v818 = vadd.f32 %v814, 1.0
    %v819 = vadd.f32 %v816, 1.0
    %v820 = vrcp.pop %v817
    %v821 = vmul.f32 1.0, %v820
    %v822 = vrcp.pop %v818
    %v823 = vmul.f32 1.0, %v822
    %v824 = vrcp.pop %v819
    %v825 = vmul.f32 1.0, %v824
    %v826 = vtanh.pop %v807
    %v827 = vmul.f32 %v823, 0.0
    %v828 = vmul.f32 %v821, %v826
    %v829 = vadd.f32 %v827, %v828
    %v830 = vtanh.pop %v829
    %v831 = vmul.f32 %v825, %v830
    %s832 = smul.u32 1, 4
    %s833 = smul.addr %s832, 8
    %s834 = scalar_lea.vmem [#allocation2], %s833
    %v835 = vld [vmem:[%s834] sm:$0xff]
    %v836 = vld [vmem:[%s834 + $0x8] sm:$0xff]
    %v837 = vld [vmem:[%s834 + $0x10] sm:$0xff]
    %v838 = vld [vmem:[%s834 + $0x18] sm:$0xff]
    %v839 = vpack.c.bf16 %v831, %v831
    %840 = vmatprep.subr.bf16.mxu0 %v659
    %841 = vmatpush1.bf16.msra.mxu0 %v658
    %842 = vmatprep.subr.bf16.mxu0 %v663
    %843 = vmatpush1.bf16.msra.mxu0 %v662
    %844 = vmatprep.subr.bf16.mxu0 %v667
    %845 = vmatpush1.bf16.msra.mxu0 %v666
    %846 = vmatprep.subr.bf16.mxu0 %v671
    %847 = vmatpush1.bf16.msra.mxu0 %v670
    %848 = vmatprep.subr.bf16.mxu0 %v675
    %849 = vmatpush1.bf16.msra.mxu0 %v674
    %850 = vmatprep.subr.bf16.mxu0 %v679
    %851 = vmatpush1.bf16.msra.mxu0 %v678
    %852 = vmatprep.subr.bf16.mxu0 %v683
    %853 = vmatpush1.bf16.msra.mxu0 %v682
    %854 = vmatprep.subr.bf16.mxu0 %v687
    %855 = vmatpush1.bf16.msra.mxu0 %v686
    %856 = vmatprep.subr.bf16.mxu0 0
    %857 = vmatpush1.bf16.msra.mxu0 0
    %858 = vmatprep.subr.bf16.mxu0 0
    %859 = vmatpush1.bf16.msra.mxu0 0
    %860 = vmatprep.subr.bf16.mxu0 0
    %861 = vmatpush1.bf16.msra.mxu0 0
    %862 = vmatprep.subr.bf16.mxu0 0
    %863 = vmatpush1.bf16.msra.mxu0 0
    %864 = vmatprep.subr.bf16.mxu0 0
    %865 = vmatpush1.bf16.msra.mxu0 0
    %866 = vmatprep.subr.bf16.mxu0 0
    %867 = vmatpush1.bf16.msra.mxu0 0
    %868 = vmatprep.subr.bf16.mxu0 0
    %869 = vmatpush1.bf16.msra.mxu0 0
    %870 = vmatprep.subr.bf16.mxu0 0
    %871 = vmatpush1.bf16.msra.mxu0 0
    %872 = vmatprep.mubr.bf16.mxu0 0
    %873 = vmatmul.mubr.bf16.gmra.mrb[0].mxu0 %v839
    %v874 = vpop.f32.mrb[0].mxu0
    %v875 = vadd.f32 0.0, %v874
    %v876 = vpop.f32.mrb[0].mxu0
    %v877 = vadd.f32 0.0, %v876
    %v878 = vpop.f32.mrb[0].mxu0
    %v879 = vpop.f32.mrb[0].mxu0
    %880 = vdwg.mxu0
    %881 = vmatprep.subr.bf16.mxu0 %v661
    %882 = vmatpush1.bf16.msra.mxu0 %v660
    %883 = vmatprep.subr.bf16.mxu0 %v665
    %884 = vmatpush1.bf16.msra.mxu0 %v664
    %885 = vmatprep.subr.bf16.mxu0 %v669
    %886 = vmatpush1.bf16.msra.mxu0 %v668
    %887 = vmatprep.subr.bf16.mxu0 %v673
    %888 = vmatpush1.bf16.msra.mxu0 %v672
    %889 = vmatprep.subr.bf16.mxu0 %v677
    %890 = vmatpush1.bf16.msra.mxu0 %v676
    %891 = vmatprep.subr.bf16.mxu0 %v681
    %892 = vmatpush1.bf16.msra.mxu0 %v680
    %893 = vmatprep.subr.bf16.mxu0 %v685
    %894 = vmatpush1.bf16.msra.mxu0 %v684
    %895 = vmatprep.subr.bf16.mxu0 %v689
    %896 = vmatpush1.bf16.msra.mxu0 %v688
    %897 = vmatprep.subr.bf16.mxu0 0
    %898 = vmatpush1.bf16.msra.mxu0 0
    %899 = vmatprep.subr.bf16.mxu0 0
    %900 = vmatpush1.bf16.msra.mxu0 0
    %901 = vmatprep.subr.bf16.mxu0 0
    %902 = vmatpush1.bf16.msra.mxu0 0
    %903 = vmatprep.subr.bf16.mxu0 0
    %904 = vmatpush1.bf16.msra.mxu0 0
    %905 = vmatprep.subr.bf16.mxu0 0
    %906 = vmatpush1.bf16.msra.mxu0 0
    %907 = vmatprep.subr.bf16.mxu0 0
    %908 = vmatpush1.bf16.msra.mxu0 0
    %909 = vmatprep.subr.bf16.mxu0 0
    %910 = vmatpush1.bf16.msra.mxu0 0
    %911 = vmatprep.subr.bf16.mxu0 0
    %912 = vmatpush1.bf16.msra.mxu0 0
    %913 = vmatprep.mubr.bf16.mxu0 0
    %914 = vmatmul.mubr.bf16.gmra.mrb[0].mxu0 %v839
    %v915 = vpop.f32.mrb[0].mxu0
    %v916 = vadd.f32 0.0, %v915
    %v917 = vpop.f32.mrb[0].mxu0
    %v918 = vadd.f32 0.0, %v917
    %v919 = vpop.f32.mrb[0].mxu0
    %v920 = vpop.f32.mrb[0].mxu0
    %921 = vdwg.mxu0
    %v922 = vadd.f32 %v835, %v875
    %v923 = vadd.f32 %v836, %v877
    %v924 = vadd.f32 %v837, %v916
    %v925 = vadd.f32 %v838, %v918
    %v926 = vxor.u32 %v922, 2147483648
    %v927 = vxor.u32 %v923, 2147483648
    %v928 = vxor.u32 %v924, 2147483648
    %v929 = vmul.f32 %v926, 1.442695
    %v930 = vpow.pop %v929
    %v931 = vmul.f32 %v927, 1.442695
    %v932 = vpow.pop %v931
    %v933 = vmul.f32 %v928, 1.442695
    %v934 = vpow.pop %v933
    %v935 = vadd.f32 %v930, 1.0
    %v936 = vadd.f32 %v932, 1.0
    %v937 = vadd.f32 %v934, 1.0
    %v938 = vrcp.pop %v935
    %v939 = vmul.f32 1.0, %v938
    %v940 = vrcp.pop %v936
    %v941 = vmul.f32 1.0, %v940
    %v942 = vrcp.pop %v937
    %v943 = vmul.f32 1.0, %v942
    %v944 = vtanh.pop %v925
    %v945 = vmul.f32 %v941, %v829
    %v946 = vmul.f32 %v939, %v944
    %v947 = vadd.f32 %v945, %v946
    %v948 = vtanh.pop %v947
    %v949 = vmul.f32 %v943, %v948
    %s950 = smul.u32 2, 4
    %s951 = smul.addr %s950, 8
    %s952 = scalar_lea.vmem [#allocation2], %s951
    %v953 = vld [vmem:[%s952] sm:$0xff]
    %v954 = vld [vmem:[%s952 + $0x8] sm:$0xff]
    %v955 = vld [vmem:[%s952 + $0x10] sm:$0xff]
    %v956 = vld [vmem:[%s952 + $0x18] sm:$0xff]
    %v957 = vpack.c.bf16 %v949, %v949
    %958 = vmatprep.subr.bf16.mxu0 %v659
    %959 = vmatpush1.bf16.msra.mxu0 %v658
    %960 = vmatprep.subr.bf16.mxu0 %v663
    %961 = vmatpush1.bf16.msra.mxu0 %v662
    %962 = vmatprep.subr.bf16.mxu0 %v667
    %963 = vmatpush1.bf16.msra.mxu0 %v666
    %964 = vmatprep.subr.bf16.mxu0 %v671
    %965 = vmatpush1.bf16.msra.mxu0 %v670
    %966 = vmatprep.subr.bf16.mxu0 %v675
    %967 = vmatpush1.bf16.msra.mxu0 %v674
    %968 = vmatprep.subr.bf16.mxu0 %v679
    %969 = vmatpush1.bf16.msra.mxu0 %v678
    %970 = vmatprep.subr.bf16.mxu0 %v683
    %971 = vmatpush1.bf16.msra.mxu0 %v682
    %972 = vmatprep.subr.bf16.mxu0 %v687
    %973 = vmatpush1.bf16.msra.mxu0 %v686
    %974 = vmatprep.subr.bf16.mxu0 0
    %975 = vmatpush1.bf16.msra.mxu0 0
    %976 = vmatprep.subr.bf16.mxu0 0
    %977 = vmatpush1.bf16.msra.mxu0 0
    %978 = vmatprep.subr.bf16.mxu0 0
    %979 = vmatpush1.bf16.msra.mxu0 0
    %980 = vmatprep.subr.bf16.mxu0 0
    %981 = vmatpush1.bf16.msra.mxu0 0
    %982 = vmatprep.subr.bf16.mxu0 0
    %983 = vmatpush1.bf16.msra.mxu0 0
    %984 = vmatprep.subr.bf16.mxu0 0
    %985 = vmatpush1.bf16.msra.mxu0 0
    %986 = vmatprep.subr.bf16.mxu0 0
    %987 = vmatpush1.bf16.msra.mxu0 0
    %988 = vmatprep.subr.bf16.mxu0 0
    %989 = vmatpush1.bf16.msra.mxu0 0
    %990 = vmatprep.mubr.bf16.mxu0 0
    %991 = vmatmul.mubr.bf16.gmra.mrb[0].mxu0 %v957
    %v992 = vpop.f32.mrb[0].mxu0
    %v993 = vadd.f32 0.0, %v992
    %v994 = vpop.f32.mrb[0].mxu0
    %v995 = vadd.f32 0.0, %v994
    %v996 = vpop.f32.mrb[0].mxu0
    %v997 = vpop.f32.mrb[0].mxu0
    %998 = vdwg.mxu0
    %999 = vmatprep.subr.bf16.mxu0 %v661
    %1000 = vmatpush1.bf16.msra.mxu0 %v660
    %1001 = vmatprep.subr.bf16.mxu0 %v665
    %1002 = vmatpush1.bf16.msra.mxu0 %v664
    %1003 = vmatprep.subr.bf16.mxu0 %v669
    %1004 = vmatpush1.bf16.msra.mxu0 %v668
    %1005 = vmatprep.subr.bf16.mxu0 %v673
    %1006 = vmatpush1.bf16.msra.mxu0 %v672
    %1007 = vmatprep.subr.bf16.mxu0 %v677
    %1008 = vmatpush1.bf16.msra.mxu0 %v676
    %1009 = vmatprep.subr.bf16.mxu0 %v681
    %1010 = vmatpush1.bf16.msra.mxu0 %v680
    %1011 = vmatprep.subr.bf16.mxu0 %v685
    %1012 = vmatpush1.bf16.msra.mxu0 %v684
    %1013 = vmatprep.subr.bf16.mxu0 %v689
    %1014 = vmatpush1.bf16.msra.mxu0 %v688
    %1015 = vmatprep.subr.bf16.mxu0 0
    %1016 = vmatpush1.bf16.msra.mxu0 0
    %1017 = vmatprep.subr.bf16.mxu0 0
    %1018 = vmatpush1.bf16.msra.mxu0 0
    %1019 = vmatprep.subr.bf16.mxu0 0
    %1020 = vmatpush1.bf16.msra.mxu0 0
    %1021 = vmatprep.subr.bf16.mxu0 0
    %1022 = vmatpush1.bf16.msra.mxu0 0
    %1023 = vmatprep.subr.bf16.mxu0 0
    %1024 = vmatpush1.bf16.msra.mxu0 0
    %1025 = vmatprep.subr.bf16.mxu0 0
    %1026 = vmatpush1.bf16.msra.mxu0 0
    %1027 = vmatprep.subr.bf16.mxu0 0
    %1028 = vmatpush1.bf16.msra.mxu0 0
    %1029 = vmatprep.subr.bf16.mxu0 0
    %1030 = vmatpush1.bf16.msra.mxu0 0
    %1031 = vmatprep.mubr.bf16.mxu0 0
    %1032 = vmatmul.mubr.bf16.gmra.mrb[0].mxu0 %v957
    %v1033 = vpop.f32.mrb[0].mxu0
    %v1034 = vadd.f32 0.0, %v1033
    %v1035 = vpop.f32.mrb[0].mxu0
    %v1036 = vadd.f32 0.0, %v1035
    %v1037 = vpop.f32.mrb[0].mxu0
    %v1038 = vpop.f32.mrb[0].mxu0
    %1039 = vdwg.mxu0
    %v1040 = vadd.f32 %v953, %v993
    %v1041 = vadd.f32 %v954, %v995
    %v1042 = vadd.f32 %v955, %v1034
    %v1043 = vadd.f32 %v956, %v1036
    %v1044 = vxor.u32 %v1040, 2147483648
    %v1045 = vxor.u32 %v1041, 2147483648
    %v1046 = vxor.u32 %v1042, 2147483648
    %v1047 = vmul.f32 %v1044, 1.442695
    %v1048 = vpow.pop %v1047
    %v1049 = vmul.f32 %v1045, 1.442695
    %v1050 = vpow.pop %v1049
    %v1051 = vmul.f32 %v1046, 1.442695
    %v1052 = vpow.pop %v1051
    %v1053 = vadd.f32 %v1048, 1.0
    %v1054 = vadd.f32 %v1050, 1.0
    %v1055 = vadd.f32 %v1052, 1.0
    %v1056 = vrcp.pop %v1053
    %v1057 = vmul.f32 1.0, %v1056
    %v1058 = vrcp.pop %v1054
    %v1059 = vmul.f32 1.0, %v1058
    %v1060 = vrcp.pop %v1055
    %v1061 = vmul.f32 1.0, %v1060
    %v1062 = vtanh.pop %v1043
    %v1063 = vmul.f32 %v1059, %v947
    %v1064 = vmul.f32 %v1057, %v1062
    %v1065 = vadd.f32 %v1063, %v1064
    %v1066 = vtanh.pop %v1065
    %v1067 = vmul.f32 %v1061, %v1066
    %s1068 = smul.u32 3, 4
    %s1069 = smul.addr %s1068, 8
    %s1070 = scalar_lea.vmem [#allocation2], %s1069
    %v1071 = vld [vmem:[%s1070] sm:$0xff]
    %v1072 = vld [vmem:[%s1070 + $0x8] sm:$0xff]
    %v1073 = vld [vmem:[%s1070 + $0x10] sm:$0xff]
    %v1074 = vld [vmem:[%s1070 + $0x18] sm:$0xff]
    %v1075 = vpack.c.bf16 %v1067, %v1067
    %1076 = vmatprep.subr.bf16.mxu0 %v659
    %1077 = vmatpush1.bf16.msra.mxu0 %v658
    %1078 = vmatprep.subr.bf16.mxu0 %v663
    %1079 = vmatpush1.bf16.msra.mxu0 %v662
    %1080 = vmatprep.subr.bf16.mxu0 %v667
    %1081 = vmatpush1.bf16.msra.mxu0 %v666
    %1082 = vmatprep.subr.bf16.mxu0 %v671
    %1083 = vmatpush1.bf16.msra.mxu0 %v670
    %1084 = vmatprep.subr.bf16.mxu0 %v675
    %1085 = vmatpush1.bf16.msra.mxu0 %v674
    %1086 = vmatprep.subr.bf16.mxu0 %v679
    %1087 = vmatpush1.bf16.msra.mxu0 %v678
    %1088 = vmatprep.subr.bf16.mxu0 %v683
    %1089 = vmatpush1.bf16.msra.mxu0 %v682
    %1090 = vmatprep.subr.bf16.mxu0 %v687
    %1091 = vmatpush1.bf16.msra.mxu0 %v686
    %1092 = vmatprep.subr.bf16.mxu0 0
    %1093 = vmatpush1.bf16.msra.mxu0 0
    %1094 = vmatprep.subr.bf16.mxu0 0
    %1095 = vmatpush1.bf16.msra.mxu0 0
    %1096 = vmatprep.subr.bf16.mxu0 0
    %1097 = vmatpush1.bf16.msra.mxu0 0
    %1098 = vmatprep.subr.bf16.mxu0 0
    %1099 = vmatpush1.bf16.msra.mxu0 0
    %1100 = vmatprep.subr.bf16.mxu0 0
    %1101 = vmatpush1.bf16.msra.mxu0 0
    %1102 = vmatprep.subr.bf16.mxu0 0
    %1103 = vmatpush1.bf16.msra.mxu0 0
    %1104 = vmatprep.subr.bf16.mxu0 0
    %1105 = vmatpush1.bf16.msra.mxu0 0
    %1106 = vmatprep.subr.bf16.mxu0 0
    %1107 = vmatpush1.bf16.msra.mxu0 0
    %1108 = vmatprep.mubr.bf16.mxu0 0
    %1109 = vmatmul.mubr.bf16.gmra.mrb[0].mxu0 %v1075
    %v1110 = vpop.f32.mrb[0].mxu0
    %v1111 = vadd.f32 0.0, %v1110
    %v1112 = vpop.f32.mrb[0].mxu0
    %v1113 = vadd.f32 0.0, %v1112
    %v1114 = vpop.f32.mrb[0].mxu0
    %v1115 = vpop.f32.mrb[0].mxu0
    %1116 = vdwg.mxu0
    %1117 = vmatprep.subr.bf16.mxu0 %v661
    %1118 = vmatpush1.bf16.msra.mxu0 %v660
    %1119 = vmatprep.subr.bf16.mxu0 %v665
    %1120 = vmatpush1.bf16.msra.mxu0 %v664
    %1121 = vmatprep.subr.bf16.mxu0 %v669
    %1122 = vmatpush1.bf16.msra.mxu0 %v668
    %1123 = vmatprep.subr.bf16.mxu0 %v673
    %1124 = vmatpush1.bf16.msra.mxu0 %v672
    %1125 = vmatprep.subr.bf16.mxu0 %v677
    %1126 = vmatpush1.bf16.msra.mxu0 %v676
    %1127 = vmatprep.subr.bf16.mxu0 %v681
    %1128 = vmatpush1.bf16.msra.mxu0 %v680
    %1129 = vmatprep.subr.bf16.mxu0 %v685
    %1130 = vmatpush1.bf16.msra.mxu0 %v684
    %1131 = vmatprep.subr.bf16.mxu0 %v689
    %1132 = vmatpush1.bf16.msra.mxu0 %v688
    %1133 = vmatprep.subr.bf16.mxu0 0
    %1134 = vmatpush1.bf16.msra.mxu0 0
    %1135 = vmatprep.subr.bf16.mxu0 0
    %1136 = vmatpush1.bf16.msra.mxu0 0
    %1137 = vmatprep.subr.bf16.mxu0 0
    %1138 = vmatpush1.bf16.msra.mxu0 0
    %1139 = vmatprep.subr.bf16.mxu0 0
    %1140 = vmatpush1.bf16.msra.mxu0 0
    %1141 = vmatprep.subr.bf16.mxu0 0
    %1142 = vmatpush1.bf16.msra.mxu0 0
    %1143 = vmatprep.subr.bf16.mxu0 0
    %1144 = vmatpush1.bf16.msra.mxu0 0
    %1145 = vmatprep.subr.bf16.mxu0 0
    %1146 = vmatpush1.bf16.msra.mxu0 0
    %1147 = vmatprep.subr.bf16.mxu0 0
    %1148 = vmatpush1.bf16.msra.mxu0 0
    %1149 = vmatprep.mubr.bf16.mxu0 0
    %1150 = vmatmul.mubr.bf16.gmra.mrb[0].mxu0 %v1075
    %v1151 = vpop.f32.mrb[0].mxu0
    %v1152 = vadd.f32 0.0, %v1151
    %v1153 = vpop.f32.mrb[0].mxu0
    %v1154 = vadd.f32 0.0, %v1153
    %v1155 = vpop.f32.mrb[0].mxu0
    %v1156 = vpop.f32.mrb[0].mxu0
    %1157 = vdwg.mxu0
    %v1158 = vadd.f32 %v1071, %v1111
    %v1159 = vadd.f32 %v1072, %v1113
    %v1160 = vadd.f32 %v1073, %v1152
    %v1161 = vadd.f32 %v1074, %v1154
    %v1162 = vxor.u32 %v1158, 2147483648
    %v1163 = vxor.u32 %v1159, 2147483648
    %v1164 = vxor.u32 %v1160, 2147483648
    %v1165 = vmul.f32 %v1162, 1.442695
    %v1166 = vpow.pop %v1165
    %v1167 = vmul.f32 %v1163, 1.442695
    %v1168 = vpow.pop %v1167
    %v1169 = vmul.f32 %v1164, 1.442695
    %v1170 = vpow.pop %v1169
    %v1171 = vadd.f32 %v1166, 1.0
    %v1172 = vadd.f32 %v1168, 1.0
    %v1173 = vadd.f32 %v1170, 1.0
    %v1174 = vrcp.pop %v1171
    %v1175 = vmul.f32 1.0, %v1174
    %v1176 = vrcp.pop %v1172
    %v1177 = vmul.f32 1.0, %v1176
    %v1178 = vrcp.pop %v1173
    %v1179 = vmul.f32 1.0, %v1178
    %v1180 = vtanh.pop %v1161
    %v1181 = vmul.f32 %v1177, %v1065
    %v1182 = vmul.f32 %v1175, %v1180
    %v1183 = vadd.f32 %v1181, %v1182
    %v1184 = vtanh.pop %v1183
    %v1185 = vmul.f32 %v1179, %v1184
    %s1186 = smul.u32 4, 4
    %s1187 = smul.addr %s1186, 8
    %s1188 = scalar_lea.vmem [#allocation2], %s1187
    %v1189 = vld [vmem:[%s1188] sm:$0xff]
    %v1190 = vld [vmem:[%s1188 + $0x8] sm:$0xff]
    %v1191 = vld [vmem:[%s1188 + $0x10] sm:$0xff]
    %v1192 = vld [vmem:[%s1188 + $0x18] sm:$0xff]
    %v1193 = vpack.c.bf16 %v1185, %v1185
    %1194 = vmatprep.subr.bf16.mxu0 %v659
    %1195 = vmatpush1.bf16.msra.mxu0 %v658
    %1196 = vmatprep.subr.bf16.mxu0 %v663
    %1197 = vmatpush1.bf16.msra.mxu0 %v662
    %1198 = vmatprep.subr.bf16.mxu0 %v667
    %1199 = vmatpush1.bf16.msra.mxu0 %v666
    %1200 = vmatprep.subr.bf16.mxu0 %v671
    %1201 = vmatpush1.bf16.msra.mxu0 %v670
    %1202 = vmatprep.subr.bf16.mxu0 %v675
    %1203 = vmatpush1.bf16.msra.mxu0 %v674
    %1204 = vmatprep.subr.bf16.mxu0 %v679
    %1205 = vmatpush1.bf16.msra.mxu0 %v678
    %1206 = vmatprep.subr.bf16.mxu0 %v683
    %1207 = vmatpush1.bf16.msra.mxu0 %v682
    %1208 = vmatprep.subr.bf16.mxu0 %v687
    %1209 = vmatpush1.bf16.msra.mxu0 %v686
    %1210 = vmatprep.subr.bf16.mxu0 0
    %1211 = vmatpush1.bf16.msra.mxu0 0
    %1212 = vmatprep.subr.bf16.mxu0 0
    %1213 = vmatpush1.bf16.msra.mxu0 0
    %1214 = vmatprep.subr.bf16.mxu0 0
    %1215 = vmatpush1.bf16.msra.mxu0 0
    %1216 = vmatprep.subr.bf16.mxu0 0
    %1217 = vmatpush1.bf16.msra.mxu0 0
    %1218 = vmatprep.subr.bf16.mxu0 0
    %1219 = vmatpush1.bf16.msra.mxu0 0
    %1220 = vmatprep.subr.bf16.mxu0 0
    %1221 = vmatpush1.bf16.msra.mxu0 0
    %1222 = vmatprep.subr.bf16.mxu0 0
    %1223 = vmatpush1.bf16.msra.mxu0 0
    %1224 = vmatprep.subr.bf16.mxu0 0
    %1225 = vmatpush1.bf16.msra.mxu0 0
    %1226 = vmatprep.mubr.bf16.mxu0 0
    %1227 = vmatmul.mubr.bf16.gmra.mrb[0].mxu0 %v1193
    %v1228 = vpop.f32.mrb[0].mxu0
    %v1229 = vadd.f32 0.0, %v1228
    %v1230 = vpop.f32.mrb[0].mxu0
    %v1231 = vadd.f32 0.0, %v1230
    %v1232 = vpop.f32.mrb[0].mxu0
    %v1233 = vpop.f32.mrb[0].mxu0
    %1234 = vdwg.mxu0
    %1235 = vmatprep.subr.bf16.mxu0 %v661
    %1236 = vmatpush1.bf16.msra.mxu0 %v660
    %1237 = vmatprep.subr.bf16.mxu0 %v665
    %1238 = vmatpush1.bf16.msra.mxu0 %v664
    %1239 = vmatprep.subr.bf16.mxu0 %v669
    %1240 = vmatpush1.bf16.msra.mxu0 %v668
    %1241 = vmatprep.subr.bf16.mxu0 %v673
    %1242 = vmatpush1.bf16.msra.mxu0 %v672
    %1243 = vmatprep.subr.bf16.mxu0 %v677
    %1244 = vmatpush1.bf16.msra.mxu0 %v676
    %1245 = vmatprep.subr.bf16.mxu0 %v681
    %1246 = vmatpush1.bf16.msra.mxu0 %v680
    %1247 = vmatprep.subr.bf16.mxu0 %v685
    %1248 = vmatpush1.bf16.msra.mxu0 %v684
    %1249 = vmatprep.subr.bf16.mxu0 %v689
    %1250 = vmatpush1.bf16.msra.mxu0 %v688
    %1251 = vmatprep.subr.bf16.mxu0 0
    %1252 = vmatpush1.bf16.msra.mxu0 0
    %1253 = vmatprep.subr.bf16.mxu0 0
    %1254 = vmatpush1.bf16.msra.mxu0 0
    %1255 = vmatprep.subr.bf16.mxu0 0
    %1256 = vmatpush1.bf16.msra.mxu0 0
    %1257 = vmatprep.subr.bf16.mxu0 0
    %1258 = vmatpush1.bf16.msra.mxu0 0
    %1259 = vmatprep.subr.bf16.mxu0 0
    %1260 = vmatpush1.bf16.msra.mxu0 0
    %1261 = vmatprep.subr.bf16.mxu0 0
    %1262 = vmatpush1.bf16.msra.mxu0 0
    %1263 = vmatprep.subr.bf16.mxu0 0
    %1264 = vmatpush1.bf16.msra.mxu0 0
    %1265 = vmatprep.subr.bf16.mxu0 0
    %1266 = vmatpush1.bf16.msra.mxu0 0
    %1267 = vmatprep.mubr.bf16.mxu0 0
    %1268 = vmatmul.mubr.bf16.gmra.mrb[0].mxu0 %v1193
    %v1269 = vpop.f32.mrb[0].mxu0
    %v1270 = vadd.f32 0.0, %v1269
    %v1271 = vpop.f32.mrb[0].mxu0
    %v1272 = vadd.f32 0.0, %v1271
    %v1273 = vpop.f32.mrb[0].mxu0
    %v1274 = vpop.f32.mrb[0].mxu0
    %1275 = vdwg.mxu0
    %v1276 = vadd.f32 %v1189, %v1229
    %v1277 = vadd.f32 %v1190, %v1231
    %v1278 = vadd.f32 %v1191, %v1270
    %v1279 = vadd.f32 %v1192, %v1272
    %v1280 = vxor.u32 %v1276, 2147483648
    %v1281 = vxor.u32 %v1277, 2147483648
    %v1282 = vxor.u32 %v1278, 2147483648
    %v1283 = vmul.f32 %v1280, 1.442695
    %v1284 = vpow.pop %v1283
    %v1285 = vmul.f32 %v1281, 1.442695
    %v1286 = vpow.pop %v1285
    %v1287 = vmul.f32 %v1282, 1.442695
    %v1288 = vpow.pop %v1287
    %v1289 = vadd.f32 %v1284, 1.0
    %v1290 = vadd.f32 %v1286, 1.0
    %v1291 = vadd.f32 %v1288, 1.0
    %v1292 = vrcp.pop %v1289
    %v1293 = vmul.f32 1.0, %v1292
    %v1294 = vrcp.pop %v1290
    %v1295 = vmul.f32 1.0, %v1294
    %v1296 = vrcp.pop %v1291
    %v1297 = vmul.f32 1.0, %v1296
    %v1298 = vtanh.pop %v1279
    %v1299 = vmul.f32 %v1295, %v1183
    %v1300 = vmul.f32 %v1293, %v1298
    %v1301 = vadd.f32 %v1299, %v1300
    %v1302 = vtanh.pop %v1301
    %v1303 = vmul.f32 %v1297, %v1302
    %s1304 = smul.u32 5, 4
    %s1305 = smul.addr %s1304, 8
    %s1306 = scalar_lea.vmem [#allocation2], %s1305
    %v1307 = vld [vmem:[%s1306] sm:$0xff]
    %v1308 = vld [vmem:[%s1306 + $0x8] sm:$0xff]
    %v1309 = vld [vmem:[%s1306 + $0x10] sm:$0xff]
    %v1310 = vld [vmem:[%s1306 + $0x18] sm:$0xff]
    %v1311 = vpack.c.bf16 %v1303, %v1303
    %1312 = vmatprep.subr.bf16.mxu0 %v659
    %1313 = vmatpush1.bf16.msra.mxu0 %v658
    %1314 = vmatprep.subr.bf16.mxu0 %v663
    %1315 = vmatpush1.bf16.msra.mxu0 %v662
    %1316 = vmatprep.subr.bf16.mxu0 %v667
    %1317 = vmatpush1.bf16.msra.mxu0 %v666
    %1318 = vmatprep.subr.bf16.mxu0 %v671
    %1319 = vmatpush1.bf16.msra.mxu0 %v670
    %1320 = vmatprep.subr.bf16.mxu0 %v675
    %1321 = vmatpush1.bf16.msra.mxu0 %v674
    %1322 = vmatprep.subr.bf16.mxu0 %v679
    %1323 = vmatpush1.bf16.msra.mxu0 %v678
    %1324 = vmatprep.subr.bf16.mxu0 %v683
    %1325 = vmatpush1.bf16.msra.mxu0 %v682
    %1326 = vmatprep.subr.bf16.mxu0 %v687
    %1327 = vmatpush1.bf16.msra.mxu0 %v686
    %1328 = vmatprep.subr.bf16.mxu0 0
    %1329 = vmatpush1.bf16.msra.mxu0 0
    %1330 = vmatprep.subr.bf16.mxu0 0
    %1331 = vmatpush1.bf16.msra.mxu0 0
    %1332 = vmatprep.subr.bf16.mxu0 0
    %1333 = vmatpush1.bf16.msra.mxu0 0
    %1334 = vmatprep.subr.bf16.mxu0 0
    %1335 = vmatpush1.bf16.msra.mxu0 0
    %1336 = vmatprep.subr.bf16.mxu0 0
    %1337 = vmatpush1.bf16.msra.mxu0 0
    %1338 = vmatprep.subr.bf16.mxu0 0
    %1339 = vmatpush1.bf16.msra.mxu0 0
    %1340 = vmatprep.subr.bf16.mxu0 0
    %1341 = vmatpush1.bf16.msra.mxu0 0
    %1342 = vmatprep.subr.bf16.mxu0 0
    %1343 = vmatpush1.bf16.msra.mxu0 0
    %1344 = vmatprep.mubr.bf16.mxu0 0
    %1345 = vmatmul.mubr.bf16.gmra.mrb[0].mxu0 %v1311
    %v1346 = vpop.f32.mrb[0].mxu0
    %v1347 = vadd.f32 0.0, %v1346
    %v1348 = vpop.f32.mrb[0].mxu0
    %v1349 = vadd.f32 0.0, %v1348
    %v1350 = vpop.f32.mrb[0].mxu0
    %v1351 = vpop.f32.mrb[0].mxu0
    %1352 = vdwg.mxu0
    %1353 = vmatprep.subr.bf16.mxu0 %v661
    %1354 = vmatpush1.bf16.msra.mxu0 %v660
    %1355 = vmatprep.subr.bf16.mxu0 %v665
    %1356 = vmatpush1.bf16.msra.mxu0 %v664
    %1357 = vmatprep.subr.bf16.mxu0 %v669
    %1358 = vmatpush1.bf16.msra.mxu0 %v668
    %1359 = vmatprep.subr.bf16.mxu0 %v673
    %1360 = vmatpush1.bf16.msra.mxu0 %v672
    %1361 = vmatprep.subr.bf16.mxu0 %v677
    %1362 = vmatpush1.bf16.msra.mxu0 %v676
    %1363 = vmatprep.subr.bf16.mxu0 %v681
    %1364 = vmatpush1.bf16.msra.mxu0 %v680
    %1365 = vmatprep.subr.bf16.mxu0 %v685
    %1366 = vmatpush1.bf16.msra.mxu0 %v684
    %1367 = vmatprep.subr.bf16.mxu0 %v689
    %1368 = vmatpush1.bf16.msra.mxu0 %v688
    %1369 = vmatprep.subr.bf16.mxu0 0
    %1370 = vmatpush1.bf16.msra.mxu0 0
    %1371 = vmatprep.subr.bf16.mxu0 0
    %1372 = vmatpush1.bf16.msra.mxu0 0
    %1373 = vmatprep.subr.bf16.mxu0 0
    %1374 = vmatpush1.bf16.msra.mxu0 0
    %1375 = vmatprep.subr.bf16.mxu0 0
    %1376 = vmatpush1.bf16.msra.mxu0 0
    %1377 = vmatprep.subr.bf16.mxu0 0
    %1378 = vmatpush1.bf16.msra.mxu0 0
    %1379 = vmatprep.subr.bf16.mxu0 0
    %1380 = vmatpush1.bf16.msra.mxu0 0
    %1381 = vmatprep.subr.bf16.mxu0 0
    %1382 = vmatpush1.bf16.msra.mxu0 0
    %1383 = vmatprep.subr.bf16.mxu0 0
    %1384 = vmatpush1.bf16.msra.mxu0 0
    %1385 = vmatprep.mubr.bf16.mxu0 0
    %1386 = vmatmul.mubr.bf16.gmra.mrb[0].mxu0 %v1311
    %v1387 = vpop.f32.mrb[0].mxu0
    %v1388 = vadd.f32 0.0, %v1387
    %v1389 = vpop.f32.mrb[0].mxu0
    %v1390 = vadd.f32 0.0, %v1389
    %v1391 = vpop.f32.mrb[0].mxu0
    %v1392 = vpop.f32.mrb[0].mxu0
    %1393 = vdwg.mxu0
    %v1394 = vadd.f32 %v1307, %v1347
    %v1395 = vadd.f32 %v1308, %v1349
    %v1396 = vadd.f32 %v1309, %v1388
    %v1397 = vadd.f32 %v1310, %v1390
    %v1398 = vxor.u32 %v1394, 2147483648
    %v1399 = vxor.u32 %v1395, 2147483648
    %v1400 = vxor.u32 %v1396, 2147483648
    %v1401 = vmul.f32 %v1398, 1.442695
    %v1402 = vpow.pop %v1401
    %v1403 = vmul.f32 %v1399, 1.442695
    %v1404 = vpow.pop %v1403
    %v1405 = vmul.f32 %v1400, 1.442695
    %v1406 = vpow.pop %v1405
    %v1407 = vadd.f32 %v1402, 1.0
    %v1408 = vadd.f32 %v1404, 1.0
    %v1409 = vadd.f32 %v1406, 1.0
    %v1410 = vrcp.pop %v1407
    %v1411 = vmul.f32 1.0, %v1410
    %v1412 = vrcp.pop %v1408
    %v1413 = vmul.f32 1.0, %v1412
    %v1414 = vrcp.pop %v1409
    %v1415 = vmul.f32 1.0, %v1414
    %v1416 = vtanh.pop %v1397
    %v1417 = vmul.f32 %v1413, %v1301
    %v1418 = vmul.f32 %v1411, %v1416
    %v1419 = vadd.f32 %v1417, %v1418
    %v1420 = vtanh.pop %v1419
    %v1421 = vmul.f32 %v1415, %v1420
    %s1422 = smul.u32 6, 4
    %s1423 = smul.addr %s1422, 8
    %s1424 = scalar_lea.vmem [#allocation2], %s1423
    %v1425 = vld [vmem:[%s1424] sm:$0xff]
    %v1426 = vld [vmem:[%s1424 + $0x8] sm:$0xff]
    %v1427 = vld [vmem:[%s1424 + $0x10] sm:$0xff]
    %v1428 = vld [vmem:[%s1424 + $0x18] sm:$0xff]
    %v1429 = vpack.c.bf16 %v1421, %v1421
    %1430 = vmatprep.subr.bf16.mxu0 %v659
    %1431 = vmatpush1.bf16.msra.mxu0 %v658
    %1432 = vmatprep.subr.bf16.mxu0 %v663
    %1433 = vmatpush1.bf16.msra.mxu0 %v662
    %1434 = vmatprep.subr.bf16.mxu0 %v667
    %1435 = vmatpush1.bf16.msra.mxu0 %v666
    %1436 = vmatprep.subr.bf16.mxu0 %v671
    %1437 = vmatpush1.bf16.msra.mxu0 %v670
    %1438 = vmatprep.subr.bf16.mxu0 %v675
    %1439 = vmatpush1.bf16.msra.mxu0 %v674
    %1440 = vmatprep.subr.bf16.mxu0 %v679
    %1441 = vmatpush1.bf16.msra.mxu0 %v678
    %1442 = vmatprep.subr.bf16.mxu0 %v683
    %1443 = vmatpush1.bf16.msra.mxu0 %v682
    %1444 = vmatprep.subr.bf16.mxu0 %v687
    %1445 = vmatpush1.bf16.msra.mxu0 %v686
    %1446 = vmatprep.subr.bf16.mxu0 0
    %1447 = vmatpush1.bf16.msra.mxu0 0
    %1448 = vmatprep.subr.bf16.mxu0 0
    %1449 = vmatpush1.bf16.msra.mxu0 0
    %1450 = vmatprep.subr.bf16.mxu0 0
    %1451 = vmatpush1.bf16.msra.mxu0 0
    %1452 = vmatprep.subr.bf16.mxu0 0
    %1453 = vmatpush1.bf16.msra.mxu0 0
    %1454 = vmatprep.subr.bf16.mxu0 0
    %1455 = vmatpush1.bf16.msra.mxu0 0
    %1456 = vmatprep.subr.bf16.mxu0 0
    %1457 = vmatpush1.bf16.msra.mxu0 0
    %1458 = vmatprep.subr.bf16.mxu0 0
    %1459 = vmatpush1.bf16.msra.mxu0 0
    %1460 = vmatprep.subr.bf16.mxu0 0
    %1461 = vmatpush1.bf16.msra.mxu0 0
    %1462 = vmatprep.mubr.bf16.mxu0 0
    %1463 = vmatmul.mubr.bf16.gmra.mrb[0].mxu0 %v1429
    %v1464 = vpop.f32.mrb[0].mxu0
    %v1465 = vadd.f32 0.0, %v1464
    %v1466 = vpop.f32.mrb[0].mxu0
    %v1467 = vadd.f32 0.0, %v1466
    %v1468 = vpop.f32.mrb[0].mxu0
    %v1469 = vpop.f32.mrb[0].mxu0
    %1470 = vdwg.mxu0
    %1471 = vmatprep.subr.bf16.mxu0 %v661
    %1472 = vmatpush1.bf16.msra.mxu0 %v660
    %1473 = vmatprep.subr.bf16.mxu0 %v665
    %1474 = vmatpush1.bf16.msra.mxu0 %v664
    %1475 = vmatprep.subr.bf16.mxu0 %v669
    %1476 = vmatpush1.bf16.msra.mxu0 %v668
    %1477 = vmatprep.subr.bf16.mxu0 %v673
    %1478 = vmatpush1.bf16.msra.mxu0 %v672
    %1479 = vmatprep.subr.bf16.mxu0 %v677
    %1480 = vmatpush1.bf16.msra.mxu0 %v676
    %1481 = vmatprep.subr.bf16.mxu0 %v681
    %1482 = vmatpush1.bf16.msra.mxu0 %v680
    %1483 = vmatprep.subr.bf16.mxu0 %v685
    %1484 = vmatpush1.bf16.msra.mxu0 %v684
    %1485 = vmatprep.subr.bf16.mxu0 %v689
    %1486 = vmatpush1.bf16.msra.mxu0 %v688
    %1487 = vmatprep.subr.bf16.mxu0 0
    %1488 = vmatpush1.bf16.msra.mxu0 0
    %1489 = vmatprep.subr.bf16.mxu0 0
    %1490 = vmatpush1.bf16.msra.mxu0 0
    %1491 = vmatprep.subr.bf16.mxu0 0
    %1492 = vmatpush1.bf16.msra.mxu0 0
    %1493 = vmatprep.subr.bf16.mxu0 0
    %1494 = vmatpush1.bf16.msra.mxu0 0
    %1495 = vmatprep.subr.bf16.mxu0 0
    %1496 = vmatpush1.bf16.msra.mxu0 0
    %1497 = vmatprep.subr.bf16.mxu0 0
    %1498 = vmatpush1.bf16.msra.mxu0 0
    %1499 = vmatprep.subr.bf16.mxu0 0
    %1500 = vmatpush1.bf16.msra.mxu0 0
    %1501 = vmatprep.subr.bf16.mxu0 0
    %1502 = vmatpush1.bf16.msra.mxu0 0
    %1503 = vmatprep.mubr.bf16.mxu0 0
    %1504 = vmatmul.mubr.bf16.gmra.mrb[0].mxu0 %v1429
    %v1505 = vpop.f32.mrb[0].mxu0
    %v1506 = vadd.f32 0.0, %v1505
    %v1507 = vpop.f32.mrb[0].mxu0
    %v1508 = vadd.f32 0.0, %v1507
    %v1509 = vpop.f32.mrb[0].mxu0
    %v1510 = vpop.f32.mrb[0].mxu0
    %1511 = vdwg.mxu0
    %v1512 = vadd.f32 %v1425, %v1465
    %v1513 = vadd.f32 %v1426, %v1467
    %v1514 = vadd.f32 %v1427, %v1506
    %v1515 = vadd.f32 %v1428, %v1508
    %v1516 = vxor.u32 %v1512, 2147483648
    %v1517 = vxor.u32 %v1513, 2147483648
    %v1518 = vxor.u32 %v1514, 2147483648
    %v1519 = vmul.f32 %v1516, 1.442695
    %v1520 = vpow.pop %v1519
    %v1521 = vmul.f32 %v1517, 1.442695
    %v1522 = vpow.pop %v1521
    %v1523 = vmul.f32 %v1518, 1.442695
    %v1524 = vpow.pop %v1523
    %v1525 = vadd.f32 %v1520, 1.0
    %v1526 = vadd.f32 %v1522, 1.0
    %v1527 = vadd.f32 %v1524, 1.0
    %v1528 = vrcp.pop %v1525
    %v1529 = vmul.f32 1.0, %v1528
    %v1530 = vrcp.pop %v1526
    %v1531 = vmul.f32 1.0, %v1530
    %v1532 = vrcp.pop %v1527
    %v1533 = vmul.f32 1.0, %v1532
    %v1534 = vtanh.pop %v1515
    %v1535 = vmul.f32 %v1531, %v1419
    %v1536 = vmul.f32 %v1529, %v1534
    %v1537 = vadd.f32 %v1535, %v1536
    %v1538 = vtanh.pop %v1537
    %v1539 = vmul.f32 %v1533, %v1538
    %s1540 = smul.u32 7, 4
    %s1541 = smul.addr %s1540, 8
    %s1542 = scalar_lea.vmem [#allocation2], %s1541
    %v1543 = vld [vmem:[%s1542] sm:$0xff]
    %v1544 = vld [vmem:[%s1542 + $0x8] sm:$0xff]
    %v1545 = vld [vmem:[%s1542 + $0x10] sm:$0xff]
    %v1546 = vld [vmem:[%s1542 + $0x18] sm:$0xff]
    %v1547 = vpack.c.bf16 %v1539, %v1539
    %1548 = vmatprep.subr.bf16.mxu0 %v659
    %1549 = vmatpush1.bf16.msra.mxu0 %v658
    %1550 = vmatprep.subr.bf16.mxu0 %v663
    %1551 = vmatpush1.bf16.msra.mxu0 %v662
    %1552 = vmatprep.subr.bf16.mxu0 %v667
    %1553 = vmatpush1.bf16.msra.mxu0 %v666
    %1554 = vmatprep.subr.bf16.mxu0 %v671
    %1555 = vmatpush1.bf16.msra.mxu0 %v670
    %1556 = vmatprep.subr.bf16.mxu0 %v675
    %1557 = vmatpush1.bf16.msra.mxu0 %v674
    %1558 = vmatprep.subr.bf16.mxu0 %v679
    %1559 = vmatpush1.bf16.msra.mxu0 %v678
    %1560 = vmatprep.subr.bf16.mxu0 %v683
    %1561 = vmatpush1.bf16.msra.mxu0 %v682
    %1562 = vmatprep.subr.bf16.mxu0 %v687
    %1563 = vmatpush1.bf16.msra.mxu0 %v686
    %1564 = vmatprep.subr.bf16.mxu0 0
    %1565 = vmatpush1.bf16.msra.mxu0 0
    %1566 = vmatprep.subr.bf16.mxu0 0
    %1567 = vmatpush1.bf16.msra.mxu0 0
    %1568 = vmatprep.subr.bf16.mxu0 0
    %1569 = vmatpush1.bf16.msra.mxu0 0
    %1570 = vmatprep.subr.bf16.mxu0 0
    %1571 = vmatpush1.bf16.msra.mxu0 0
    %1572 = vmatprep.subr.bf16.mxu0 0
    %1573 = vmatpush1.bf16.msra.mxu0 0
    %1574 = vmatprep.subr.bf16.mxu0 0
    %1575 = vmatpush1.bf16.msra.mxu0 0
    %1576 = vmatprep.subr.bf16.mxu0 0
    %1577 = vmatpush1.bf16.msra.mxu0 0
    %1578 = vmatprep.subr.bf16.mxu0 0
    %1579 = vmatpush1.bf16.msra.mxu0 0
    %1580 = vmatprep.mubr.bf16.mxu0 0
    %1581 = vmatmul.mubr.bf16.gmra.mrb[0].mxu0 %v1547
    %v1582 = vpop.f32.mrb[0].mxu0
    %v1583 = vadd.f32 0.0, %v1582
    %v1584 = vpop.f32.mrb[0].mxu0
    %v1585 = vadd.f32 0.0, %v1584
    %v1586 = vpop.f32.mrb[0].mxu0
    %v1587 = vpop.f32.mrb[0].mxu0
    %1588 = vdwg.mxu0
    %1589 = vmatprep.subr.bf16.mxu0 %v661
    %1590 = vmatpush1.bf16.msra.mxu0 %v660
    %1591 = vmatprep.subr.bf16.mxu0 %v665
    %1592 = vmatpush1.bf16.msra.mxu0 %v664
    %1593 = vmatprep.subr.bf16.mxu0 %v669
    %1594 = vmatpush1.bf16.msra.mxu0 %v668
    %1595 = vmatprep.subr.bf16.mxu0 %v673
    %1596 = vmatpush1.bf16.msra.mxu0 %v672
    %1597 = vmatprep.subr.bf16.mxu0 %v677
    %1598 = vmatpush1.bf16.msra.mxu0 %v676
    %1599 = vmatprep.subr.bf16.mxu0 %v681
    %1600 = vmatpush1.bf16.msra.mxu0 %v680
    %1601 = vmatprep.subr.bf16.mxu0 %v685
    %1602 = vmatpush1.bf16.msra.mxu0 %v684
    %1603 = vmatprep.subr.bf16.mxu0 %v689
    %1604 = vmatpush1.bf16.msra.mxu0 %v688
    %1605 = vmatprep.subr.bf16.mxu0 0
    %1606 = vmatpush1.bf16.msra.mxu0 0
    %1607 = vmatprep.subr.bf16.mxu0 0
    %1608 = vmatpush1.bf16.msra.mxu0 0
    %1609 = vmatprep.subr.bf16.mxu0 0
    %1610 = vmatpush1.bf16.msra.mxu0 0
    %1611 = vmatprep.subr.bf16.mxu0 0
    %1612 = vmatpush1.bf16.msra.mxu0 0
    %1613 = vmatprep.subr.bf16.mxu0 0
    %1614 = vmatpush1.bf16.msra.mxu0 0
    %1615 = vmatprep.subr.bf16.mxu0 0
    %1616 = vmatpush1.bf16.msra.mxu0 0
    %1617 = vmatprep.subr.bf16.mxu0 0
    %1618 = vmatpush1.bf16.msra.mxu0 0
    %1619 = vmatprep.subr.bf16.mxu0 0
    %1620 = vmatpush1.bf16.msra.mxu0 0
    %1621 = vmatprep.mubr.bf16.mxu0 0
    %1622 = vmatmul.mubr.bf16.gmra.mrb[0].mxu0 %v1547
    %v1623 = vpop.f32.mrb[0].mxu0
    %v1624 = vadd.f32 0.0, %v1623
    %v1625 = vpop.f32.mrb[0].mxu0
    %v1626 = vadd.f32 0.0, %v1625
    %v1627 = vpop.f32.mrb[0].mxu0
    %v1628 = vpop.f32.mrb[0].mxu0
    %1629 = vdwg.mxu0
    %v1630 = vadd.f32 %v1543, %v1583
    %v1631 = vadd.f32 %v1544, %v1585
    %v1632 = vadd.f32 %v1545, %v1624
    %v1633 = vadd.f32 %v1546, %v1626
    %v1634 = vxor.u32 %v1630, 2147483648
    %v1635 = vxor.u32 %v1631, 2147483648
    %v1636 = vxor.u32 %v1632, 2147483648
    %v1637 = vmul.f32 %v1634, 1.442695
    %v1638 = vpow.pop %v1637
    %v1639 = vmul.f32 %v1635, 1.442695
    %v1640 = vpow.pop %v1639
    %v1641 = vmul.f32 %v1636, 1.442695
    %v1642 = vpow.pop %v1641
    %v1643 = vadd.f32 %v1638, 1.0
    %v1644 = vadd.f32 %v1640, 1.0
    %v1645 = vadd.f32 %v1642, 1.0
    %v1646 = vrcp.pop %v1643
    %v1647 = vmul.f32 1.0, %v1646
    %v1648 = vrcp.pop %v1644
    %v1649 = vmul.f32 1.0, %v1648
    %v1650 = vrcp.pop %v1645
    %v1651 = vmul.f32 1.0, %v1650
    %v1652 = vtanh.pop %v1633
    %v1653 = vmul.f32 %v1649, %v1537
    %v1654 = vmul.f32 %v1647, %v1652
    %v1655 = vadd.f32 %v1653, %v1654
    %v1656 = vtanh.pop %v1655
    %v1657 = vmul.f32 %v1651, %v1656
    %v1658 = vpack.c.bf16 %v1657, %v1657
    %v1659 = vld [vmem:[#allocation9] sm:$0xf]
    %v1660 = vld [vmem:[#allocation9 + $0x4] sm:$0xf]
    %v1661 = vld [vmem:[#allocation9 + $0x8] sm:$0xf]
    %v1662 = vld [vmem:[#allocation9 + $0xc] sm:$0xf]
    %v1663 = vld [vmem:[#allocation9 + $0x10] sm:$0xf]
    %v1664 = vld [vmem:[#allocation9 + $0x14] sm:$0xf]
    %v1665 = vld [vmem:[#allocation9 + $0x18] sm:$0xf]
    %v1666 = vld [vmem:[#allocation9 + $0x1c] sm:$0xf]
    %v1667 = vld [vmem:[#allocation9 + $0x20] sm:$0xf]
    %v1668 = vld [vmem:[#allocation9 + $0x24] sm:$0xf]
    %v1669 = vld [vmem:[#allocation9 + $0x28] sm:$0xf]
    %v1670 = vld [vmem:[#allocation9 + $0x2c] sm:$0xf]
    %v1671 = vld [vmem:[#allocation9 + $0x30] sm:$0xf]
    %v1672 = vld [vmem:[#allocation9 + $0x34] sm:$0xf]
    %v1673 = vld [vmem:[#allocation9 + $0x38] sm:$0xf]
    %v1674 = vld [vmem:[#allocation9 + $0x3c] sm:$0xf]
    %v1675 = vld [vmem:[%s5] sm:$0x1]
    %v1677 = vlaneseq
    %v1678 = vshrl.u32 %v1677, 7
    %v1679 = vsub.s32 0, %v1678
    %v1680 = vrot.slane %v1675, %v1679
    %v1698 = vunpack.c.l.b16 %v1659
    %v1699 = vunpack.c.l.b16 %v1660
    %v1700 = vunpack.c.l.b16 %v1661
    %v1701 = vunpack.c.l.b16 %v1662
    %v1702 = vunpack.c.l.b16 %v1663
    %v1703 = vunpack.c.l.b16 %v1664
    %v1704 = vunpack.c.l.b16 %v1665
    %v1705 = vunpack.c.l.b16 %v1666
    %v1706 = vunpack.c.l.b16 %v1667
    %v1707 = vunpack.c.l.b16 %v1668
    %v1708 = vunpack.c.l.b16 %v1669
    %v1709 = vunpack.c.l.b16 %v1670
    %v1710 = vunpack.c.l.b16 %v1671
    %v1711 = vunpack.c.l.b16 %v1672
    %v1712 = vunpack.c.l.b16 %v1673
    %v1713 = vunpack.c.l.b16 %v1674
    %v1714 = vpack.c.b16 %v1699, %v1698
    %v1715 = vpack.c.b16 %v1701, %v1700
    %v1716 = vpack.c.b16 %v1703, %v1702
    %v1717 = vpack.c.b16 %v1705, %v1704
    %v1718 = vpack.c.b16 %v1707, %v1706
    %v1719 = vpack.c.b16 %v1709, %v1708
    %v1720 = vpack.c.b16 %v1711, %v1710
    %v1721 = vpack.c.b16 %v1713, %v1712
    %1730 = vmatprep.subr.bf16.mxu0 0
    %1731 = vmatpush1.bf16.msra.mxu0 %v1714
    %1732 = vmatprep.subr.bf16.mxu0 0
    %1733 = vmatpush1.bf16.msra.mxu0 %v1715
    %1734 = vmatprep.subr.bf16.mxu0 0
    %1735 = vmatpush1.bf16.msra.mxu0 %v1716
    %1736 = vmatprep.subr.bf16.mxu0 0
    %1737 = vmatpush1.bf16.msra.mxu0 %v1717
    %1738 = vmatprep.subr.bf16.mxu0 0
    %1739 = vmatpush1.bf16.msra.mxu0 %v1718
    %1740 = vmatprep.subr.bf16.mxu0 0
    %1741 = vmatpush1.bf16.msra.mxu0 %v1719
    %1742 = vmatprep.subr.bf16.mxu0 0
    %1743 = vmatpush1.bf16.msra.mxu0 %v1720
    %1744 = vmatprep.subr.bf16.mxu0 0
    %1745 = vmatpush1.bf16.msra.mxu0 %v1721
    %1746 = vmatprep.subr.bf16.mxu0 0
    %1747 = vmatpush1.bf16.msra.mxu0 0
    %1748 = vmatprep.subr.bf16.mxu0 0
    %1749 = vmatpush1.bf16.msra.mxu0 0
    %1750 = vmatprep.subr.bf16.mxu0 0
    %1751 = vmatpush1.bf16.msra.mxu0 0
    %1752 = vmatprep.subr.bf16.mxu0 0
    %1753 = vmatpush1.bf16.msra.mxu0 0
    %1754 = vmatprep.subr.bf16.mxu0 0
    %1755 = vmatpush1.bf16.msra.mxu0 0
    %1756 = vmatprep.subr.bf16.mxu0 0
    %1757 = vmatpush1.bf16.msra.mxu0 0
    %1758 = vmatprep.subr.bf16.mxu0 0
    %1759 = vmatpush1.bf16.msra.mxu0 0
    %1760 = vmatprep.subr.bf16.mxu0 0
    %1761 = vmatpush1.bf16.msra.mxu0 0
    %1762 = vmatprep.mubr.bf16.mxu0 0
    %1763 = vmatmul.mubr.bf16.gmra.mrb[0].mxu0 %v1658
    %v1764 = vpop.f32.mrb[0].mxu0
    %v1765 = vadd.f32 %v1680, %v1764
    %v1766 = vpop.f32.mrb[0].mxu0
    %v1767 = vpop.f32.mrb[0].mxu0
    %v1768 = vpop.f32.mrb[0].mxu0
    %1769 = vdwg.mxu0
    %v1770 = vpack.c.bf16 %v1765, %v1765
    %v1771 = vld [vmem:[#allocation11] sm:$0xf]
    %v1772 = vld [vmem:[#allocation11 + $0x4] sm:$0xf]
    %v1773 = vld [vmem:[#allocation11 + $0x8] sm:$0xf]
    %v1774 = vld [vmem:[#allocation11 + $0xc] sm:$0xf]
    %v1775 = vld [vmem:[#allocation11 + $0x10] sm:$0xf]
    %v1776 = vld [vmem:[#allocation11 + $0x14] sm:$0xf]
    %v1777 = vld [vmem:[#allocation11 + $0x18] sm:$0xf]
    %v1778 = vld [vmem:[#allocation11 + $0x1c] sm:$0xf]
    %v1779 = vld [vmem:[#allocation11 + $0x20] sm:$0xf]
    %v1780 = vld [vmem:[#allocation11 + $0x24] sm:$0xf]
    %v1781 = vld [vmem:[#allocation11 + $0x28] sm:$0xf]
    %v1782 = vld [vmem:[#allocation11 + $0x2c] sm:$0xf]
    %v1783 = vld [vmem:[#allocation11 + $0x30] sm:$0xf]
    %v1784 = vld [vmem:[#allocation11 + $0x34] sm:$0xf]
    %v1785 = vld [vmem:[#allocation11 + $0x38] sm:$0xf]
    %v1786 = vld [vmem:[#allocation11 + $0x3c] sm:$0xf]
    %v1787 = vld [vmem:[%s7] sm:$0x1]
    %v1789 = vlaneseq
    %v1790 = vshrl.u32 %v1789, 7
    %v1791 = vsub.s32 0, %v1790
    %v1792 = vrot.slane %v1787, %v1791
    %v1810 = vunpack.c.l.b16 %v1771
    %v1811 = vunpack.c.l.b16 %v1772
    %v1812 = vunpack.c.l.b16 %v1773
    %v1813 = vunpack.c.l.b16 %v1774
    %v1814 = vunpack.c.l.b16 %v1775
    %v1815 = vunpack.c.l.b16 %v1776
    %v1816 = vunpack.c.l.b16 %v1777
    %v1817 = vunpack.c.l.b16 %v1778
    %v1818 = vunpack.c.l.b16 %v1779
    %v1819 = vunpack.c.l.b16 %v1780
    %v1820 = vunpack.c.l.b16 %v1781
    %v1821 = vunpack.c.l.b16 %v1782
    %v1822 = vunpack.c.l.b16 %v1783
    %v1823 = vunpack.c.l.b16 %v1784
    %v1824 = vunpack.c.l.b16 %v1785
    %v1825 = vunpack.c.l.b16 %v1786
    %v1826 = vpack.c.b16 %v1811, %v1810
    %v1827 = vpack.c.b16 %v1813, %v1812
    %v1828 = vpack.c.b16 %v1815, %v1814
    %v1829 = vpack.c.b16 %v1817, %v1816
    %v1830 = vpack.c.b16 %v1819, %v1818
    %v1831 = vpack.c.b16 %v1821, %v1820
    %v1832 = vpack.c.b16 %v1823, %v1822
    %v1833 = vpack.c.b16 %v1825, %v1824
    %1842 = vmatprep.subr.bf16.mxu0 0
    %1843 = vmatpush1.bf16.msra.mxu0 %v1826
    %1844 = vmatprep.subr.bf16.mxu0 0
    %1845 = vmatpush1.bf16.msra.mxu0 %v1827
    %1846 = vmatprep.subr.bf16.mxu0 0
    %1847 = vmatpush1.bf16.msra.mxu0 %v1828
    %1848 = vmatprep.subr.bf16.mxu0 0
    %1849 = vmatpush1.bf16.msra.mxu0 %v1829
    %1850 = vmatprep.subr.bf16.mxu0 0
    %1851 = vmatpush1.bf16.msra.mxu0 %v1830
    %1852 = vmatprep.subr.bf16.mxu0 0
    %1853 = vmatpush1.bf16.msra.mxu0 %v1831
    %1854 = vmatprep.subr.bf16.mxu0 0
    %1855 = vmatpush1.bf16.msra.mxu0 %v1832
    %1856 = vmatprep.subr.bf16.mxu0 0
    %1857 = vmatpush1.bf16.msra.mxu0 %v1833
    %1858 = vmatprep.subr.bf16.mxu0 0
    %1859 = vmatpush1.bf16.msra.mxu0 0
    %1860 = vmatprep.subr.bf16.mxu0 0
    %1861 = vmatpush1.bf16.msra.mxu0 0
    %1862 = vmatprep.subr.bf16.mxu0 0
    %1863 = vmatpush1.bf16.msra.mxu0 0
    %1864 = vmatprep.subr.bf16.mxu0 0
    %1865 = vmatpush1.bf16.msra.mxu0 0
    %1866 = vmatprep.subr.bf16.mxu0 0
    %1867 = vmatpush1.bf16.msra.mxu0 0
    %1868 = vmatprep.subr.bf16.mxu0 0
    %1869 = vmatpush1.bf16.msra.mxu0 0
    %1870 = vmatprep.subr.bf16.mxu0 0
    %1871 = vmatpush1.bf16.msra.mxu0 0
    %1872 = vmatprep.subr.bf16.mxu0 0
    %1873 = vmatpush1.bf16.msra.mxu0 0
    %1874 = vmatprep.mubr.bf16.mxu0 0
    %1875 = vmatmul.mubr.bf16.gmra.mrb[0].mxu0 %v1770
    %v1876 = vpop.f32.mrb[0].mxu0
    %v1877 = vadd.f32 %v1792, %v1876
    %v1878 = vpop.f32.mrb[0].mxu0
    %v1879 = vpop.f32.mrb[0].mxu0
    %v1880 = vpop.f32.mrb[0].mxu0
    %1881 = vdwg.mxu0
    %1882 = vst [vmem:[#allocation12] sm:$0xff] %v1877
    // Predicated region
    $region54: #{tpu_custom_call.1} parent=1 // pred_check
      _
    $region55: #{tpu_custom_call.1} parent=1 // pred_check_branch
      %1884 = sbr.rel (0) target = $region57
    $region56: #{tpu_custom_call.1} parent=1 // pred_region
      %s1886 = ssub.s32 128, 128
      %1887 = vsyncadd [#allocation5], %s1886
      %s1889 = sshll.u32 [#allocation12], 4
      %s1890 = int_to_ptr.vmem [resolvable:$true] %s1889
      %1892 = dma.vmem_to_hbm [thread:$0]  %s1890, 128, %s8, [#allocation5]
    $region57: #{tpu_custom_call.1} parent=1 // pred_fallthru
      _
    // Predicated region
    $region58: #{tpu_custom_call.1} parent=1 // pred_check
      _
    $region59: #{tpu_custom_call.1} parent=1 // pred_check_branch
      %1894 = sbr.rel (0) target = $region61
    $region60: #{tpu_custom_call.1} parent=1 // pred_region
      %1895 = dma.done [#allocation5], 128
    $region61: #{tpu_custom_call.1} parent=1 // pred_fallthru
      _
    %1896 = vsyncpa [#allocation4], 1
    %1897 = vsyncpa [#allocation7], 1
    %1898 = vsyncpa [#allocation10], 1
    %1899 = vsyncpa [#allocation5], 1

</llo_original>
